<compile_context>
chip_gen: v7x
topology: tpu7x:2x2x1
jax: 0.10.0
libtpu: 0.0.40
codegen_flags: <defaults>
</compile_context>

<pallas_src>
import jax
import jax.numpy as jnp
import numpy as np
from jax import lax
from jax.experimental import pallas as pl
from jax.experimental.pallas import tpu as pltpu

BN_EPS = 1e-5


# --------------------------------------------------------------------------
# Fused DecoderBlock kernel (per block of Nb images):
#   x:(Nb,Cin,HW) --w1s--> y1:(Cmid, Nb*HW) --4-phase 2x2 stencil-->
#   y2:(Cmid, 4*Nb*HW) --w3s--> out:(Cout, 4*Nb*HW)
# Phase (a,b) of the k=4,s=2,p=1 depthwise transposed conv:
#   out[c, 2m+a, 2k+b] = 4-tap stencil on y1[c] around (m,k) (see wv indices).
# --------------------------------------------------------------------------
def _make_fused_kernel(Nb, H, W):
    HW = H * W
    L = Nb * HW

    def kernel(x_ref, w1_ref, s1_ref, w2_ref, s2_ref, w3_ref, s3_ref,
               mask_ref, o_ref, y1_ref, y2_ref):
        # ---- proj: 1x1 conv (BN scale folded into w1) + shift + ReLU,
        # one image at a time into the lane-concatenated y1 scratch.
        w1 = w1_ref[...]                                     # (Cmid, Cin)
        s1 = s1_ref[...]                                     # (Cmid, 1)
        for n in range(Nb):                                  # static, small
            y = jnp.dot(w1, x_ref[n], preferred_element_type=jnp.float32)
            y1_ref[:, n * HW:(n + 1) * HW] = jnp.maximum(y + s1, 0.0)
        y1 = y1_ref[...]                                     # (Cmid, L)

        # Per-image-tiled border masks: zero every position a roll wrapped
        # across an image border (the "virtual zero padding" of the deconv).
        masks = mask_ref[...]                                # (8, L)

        def tap(shift, mi):                                  # out[p] = y1[p - shift]
            return pltpu.roll(y1, shift % L, axis=1) * masks[mi:mi + 1, :]

        w2 = w2_ref[...]                                     # (16, Cmid, 1), loaded once
        s2 = s2_ref[...]                                     # (Cmid, 1)

        def wv(kh, kw):                                      # per-channel (BN-scaled) weight
            return w2[kh * 4 + kw]                           # (Cmid, 1)

        # ---- depthwise-deconv stencil, phases a=0 first (bounds live taps);
        # phases go straight into the y2 scratch (no concatenate copy).
        lf = tap(1, 2)            # y1[m,   k-1]
        rt = tap(-1, 3)           # y1[m,   k+1]
        up = tap(W, 0)            # y1[m-1, k]
        ul = tap(W + 1, 4)        # y1[m-1, k-1]
        ur = tap(W - 1, 5)        # y1[m-1, k+1]
        y2_ref[:, 0 * L:1 * L] = jnp.maximum(                # (a=0, b=0)
            y1 * wv(1, 1) + lf * wv(1, 3) + up * wv(3, 1) + ul * wv(3, 3) + s2, 0.0)
        y2_ref[:, 1 * L:2 * L] = jnp.maximum(                # (a=0, b=1)
            y1 * wv(1, 2) + rt * wv(1, 0) + up * wv(3, 2) + ur * wv(3, 0) + s2, 0.0)

        dn = tap(-W, 1)           # y1[m+1, k]
        dl = tap(-(W - 1), 6)     # y1[m+1, k-1]
        dr = tap(-(W + 1), 7)     # y1[m+1, k+1]
        y2_ref[:, 2 * L:3 * L] = jnp.maximum(                # (a=1, b=0)
            y1 * wv(2, 1) + lf * wv(2, 3) + dn * wv(0, 1) + dl * wv(0, 3) + s2, 0.0)
        y2_ref[:, 3 * L:4 * L] = jnp.maximum(                # (a=1, b=1)
            y1 * wv(2, 2) + rt * wv(2, 0) + dn * wv(0, 2) + dr * wv(0, 0) + s2, 0.0)

        # ---- unproj: ONE wide lane-dense matmul over [4 phases x Nb images]
        out = jnp.dot(w3_ref[...], y2_ref[...],
                      preferred_element_type=jnp.float32)
        o_ref[...] = jnp.maximum(out + s3_ref[...], 0.0).astype(o_ref.dtype)

    return kernel


def _stencil_masks(H, W, Nb):
    """(8, Nb*H*W) f32 validity masks for the 8 taps, tiled per image."""
    m = np.broadcast_to(np.arange(H)[:, None], (H, W))
    k = np.broadcast_to(np.arange(W)[None, :], (H, W))
    up, dn = m >= 1, m <= H - 2
    lf, rt = k >= 1, k <= W - 2
    masks = np.stack([up, dn, lf, rt, up & lf, up & rt, dn & lf, dn & rt])
    masks = masks.reshape(8, H * W).astype(np.float32)
    return jnp.asarray(np.tile(masks, (1, Nb)))              # per-image tiled on lanes


def _pick_images_per_step(N, HW, max_lanes=4096):
    """Largest divisor Nb of N with >=2 grid steps (when N>=2) and Nb*HW <= max_lanes."""
    best = 1
    min_steps = 2 if N >= 2 else 1
    for nb in range(1, N + 1):
        if N % nb == 0 and nb * HW <= max_lanes and N // nb >= min_steps:
            best = nb
    return best


def decoder_block_pallas(x_nchw, p, *, images_per_step=None):
    """Fused DecoderBlock forward: (N, Cin, H, W) -> (N, Cout, 2H, 2W)."""
    N, Cin, H, W = x_nchw.shape
    Cmid = p["w_proj"].shape[0]
    Cout = p["w_unproj"].shape[0]
    HW = H * W
    Nb = images_per_step or _pick_images_per_step(N, HW)
    assert N % Nb == 0, (N, Nb)
    nblk = N // Nb
    L = Nb * HW

    # Fold BN scales into the conv/deconv weights at trace time (free).
    w1s = p["scale1"][:, None] * p["w_proj"][:, :, 0, 0]            # (Cmid, Cin)
    w2s = p["w_deconv"][:, 0, :, :] * p["scale2"][:, None, None]    # (Cmid, 4, 4)
    w2s = jnp.transpose(w2s, (1, 2, 0)).reshape(16, Cmid, 1)        # [kh*4+kw, c, 1]
    w3s = p["scale3"][:, None] * p["w_unproj"][:, :, 0, 0]          # (Cout, Cmid)
    s1 = p["shift1"].reshape(Cmid, 1)
    s2 = p["shift2"].reshape(Cmid, 1)
    s3 = p["shift3"].reshape(Cout, 1)
    masks = _stencil_masks(H, W, Nb)

    x2 = x_nchw.reshape(N, Cin, HW)   # metadata-only; stays channel-major

    # NOTE: the 7 weight/shift/mask inputs are grid-invariant; single-buffering
    # them (pipeline_mode=pl.Buffered(1)) would free a few KiB of VMEM but is
    # irrelevant at these sizes.
    out_flat = pl.pallas_call(
        _make_fused_kernel(Nb, H, W),
        out_shape=jax.ShapeDtypeStruct((nblk, Cout, 4 * L), jnp.float32),
        grid_spec=pltpu.PrefetchScalarGridSpec(
            num_scalar_prefetch=0,
            grid=(nblk,),
            in_specs=[
                pl.BlockSpec((Nb, Cin, HW), lambda g: (g, 0, 0)),
                pl.BlockSpec((Cmid, Cin), lambda g: (0, 0)),
                pl.BlockSpec((Cmid, 1), lambda g: (0, 0)),
                pl.BlockSpec((16, Cmid, 1), lambda g: (0, 0, 0)),
                pl.BlockSpec((Cmid, 1), lambda g: (0, 0)),
                pl.BlockSpec((Cout, Cmid), lambda g: (0, 0)),
                pl.BlockSpec((Cout, 1), lambda g: (0, 0)),
                pl.BlockSpec((8, L), lambda g: (0, 0)),
            ],
            # Leading block dim squeezed -> whole-ref lane-dense store.
            out_specs=pl.BlockSpec((None, Cout, 4 * L), lambda g: (g, 0, 0)),
            scratch_shapes=[
                pltpu.VMEM((Cmid, L), jnp.float32),       # y1
                pltpu.VMEM((Cmid, 4 * L), jnp.float32),   # y2 (4 phases)
            ]),
        compiler_params=pltpu.CompilerParams(
            dimension_semantics=("parallel",),
            vmem_limit_bytes=32 * 1024 * 1024),   # safe on v5e/v6e/v7x at these block sizes
    )(x2, w1s, s1, w2s, s2, w3s, s3, masks)

    # Single combined phase/batch interleave (the only XLA pass over the output):
    # (nblk, Cout, [a, b, n_local, m, k]) -> (N, Cout, 2H, 2W), rows 2m+a, cols 2k+b.
    out = out_flat.reshape(nblk, Cout, 2, 2, Nb, H, W)
    out = out.transpose(0, 4, 1, 5, 2, 6, 3).reshape(N, Cout, 2 * H, 2 * W)
    return out


# --------------------------------------------------------------------------
# Parameters (deterministic, PyTorch-shaped) and BN folding
# --------------------------------------------------------------------------
def _bn_stats(c):
    i = jnp.arange(c, dtype=jnp.float32)
    gamma = 1.0 + 0.1 * i / max(c, 1)
    beta = 0.05 * i
    mean = 0.02 * i
    var = 1.0 + 0.03 * i
    return gamma, beta, mean, var


def _fold_bn(gamma, beta, mean, var):
    scale = gamma / jnp.sqrt(var + BN_EPS)
    shift = beta - mean * scale
    return scale, shift


def init_params(key, channels_in, channels_out):
    c_mid = channels_in // 4
    k1, k2, k3 = jax.random.split(key, 3)
    p = {
        # PyTorch weight shapes:
        "w_proj":   0.1 * jax.random.normal(k1, (c_mid, channels_in, 1, 1), jnp.float32),
        "w_deconv": 0.1 * jax.random.normal(k2, (c_mid, 1, 4, 4), jnp.float32),
        "w_unproj": 0.1 * jax.random.normal(k3, (channels_out, c_mid, 1, 1), jnp.float32),
    }
    for idx, c in zip((1, 2, 3), (c_mid, c_mid, channels_out)):
        g, b, m, v = _bn_stats(c)
        p[f"g{idx}"], p[f"b{idx}"], p[f"m{idx}"], p[f"v{idx}"] = g, b, m, v
        p[f"scale{idx}"], p[f"shift{idx}"] = _fold_bn(g, b, m, v)
    return p


# --------------------------------------------------------------------------
# Pure-JAX reference
# --------------------------------------------------------------------------
def decoder_block_ref(x, p):
    def bn(y, g, b, m, v):
        g, b, m, v = (t[None, :, None, None] for t in (g, b, m, v))
        return (y - m) / jnp.sqrt(v + BN_EPS) * g + b

    dn = lambda a, k: lax.conv_dimension_numbers(a.shape, k.shape,
                                                 ("NCHW", "OIHW", "NCHW"))
    # proj
    y = lax.conv_general_dilated(x, p["w_proj"], (1, 1), "VALID",
                                 dimension_numbers=dn(x, p["w_proj"]))
    y = jax.nn.relu(bn(y, p["g1"], p["b1"], p["m1"], p["v1"]))
    # depthwise transposed conv == dilated conv with flipped kernel
    C = y.shape[1]
    w_conv = p["w_deconv"][:, :, ::-1, ::-1]                      # (C, 1, 4, 4)
    y = lax.conv_general_dilated(y, w_conv, window_strides=(1, 1),
                                 padding=((2, 2), (2, 2)), lhs_dilation=(2, 2),
                                 dimension_numbers=dn(y, w_conv),
                                 feature_group_count=C)
    y = jax.nn.relu(bn(y, p["g2"], p["b2"], p["m2"], p["v2"]))
    # unproj
    y = lax.conv_general_dilated(y, p["w_unproj"], (1, 1), "VALID",
                                 dimension_numbers=dn(y, p["w_unproj"]))
    y = jax.nn.relu(bn(y, p["g3"], p["b3"], p["m3"], p["v3"]))
    return y


if __name__ == "__main__":
    key = jax.random.PRNGKey(0)
    channels_in, channels_out = 32, 16
    N, H, W = 4, 16, 16          # Nb=2 images/step, grid=(2,) "parallel" steps

    kx, kp = jax.random.split(key)
    x = jax.random.normal(kx, (N, channels_in, H, W), jnp.float32)
    params = init_params(kp, channels_in, channels_out)

    out = decoder_block_pallas(x, params)
    out = jax.block_until_ready(out)

    ref = decoder_block_ref(x, params)
    assert out.shape == (N, channels_out, 2 * H, 2 * W), out.shape
    np.testing.assert_allclose(np.asarray(out), np.asarray(ref), rtol=2e-4, atol=2e-4)

    print("KERNEL_OK")
</pallas_src>

<mosaic_0001>
module attributes {stable_mosaic.version = 11 : i64} {
  func.func @kernel(%arg0: i32, %arg1: memref<2x32x256xf32, #tpu.memory_space<vmem>>, %arg2: memref<8x32xf32, #tpu.memory_space<vmem>>, %arg3: memref<8x1xf32, #tpu.memory_space<vmem>>, %arg4: memref<16x8x1xf32, #tpu.memory_space<vmem>>, %arg5: memref<8x1xf32, #tpu.memory_space<vmem>>, %arg6: memref<16x8xf32, #tpu.memory_space<vmem>>, %arg7: memref<16x1xf32, #tpu.memory_space<vmem>>, %arg8: memref<8x512xf32, #tpu.memory_space<vmem>>, %arg9: memref<1x16x2048xf32, #tpu.memory_space<vmem>>, %arg10: memref<8x512xf32, #tpu.memory_space<vmem>>, %arg11: memref<8x2048xf32, #tpu.memory_space<vmem>>) attributes {dimension_semantics = [#tpu.dimension_semantics<parallel>], iteration_bounds = array<i64: 2>, scalar_prefetch = 0 : i64, scratch_operands = 2 : i64, tpu.core_type = #tpu.core_type<tc>, window_params = [{transform_indices = @transform_0, window_bounds = array<i64: 2, 32, 256>}, {pipeline_mode = #tpu.pipeline_mode<synchronous>, transform_indices = @transform_1, window_bounds = array<i64: 8, 32>}, {pipeline_mode = #tpu.pipeline_mode<synchronous>, transform_indices = @transform_2, window_bounds = array<i64: 8, 1>}, {pipeline_mode = #tpu.pipeline_mode<synchronous>, transform_indices = @transform_3, window_bounds = array<i64: 16, 8, 1>}, {pipeline_mode = #tpu.pipeline_mode<synchronous>, transform_indices = @transform_4, window_bounds = array<i64: 8, 1>}, {pipeline_mode = #tpu.pipeline_mode<synchronous>, transform_indices = @transform_5, window_bounds = array<i64: 16, 8>}, {pipeline_mode = #tpu.pipeline_mode<synchronous>, transform_indices = @transform_6, window_bounds = array<i64: 16, 1>}, {pipeline_mode = #tpu.pipeline_mode<synchronous>, transform_indices = @transform_7, window_bounds = array<i64: 8, 512>}, {transform_indices = @transform_8, window_bounds = array<i64: 1, 16, 2048>}]} {
    %c0 = arith.constant 0 : index
    %c0_0 = arith.constant 0 : index
    %0 = vector.load %arg2[%c0, %c0_0] : memref<8x32xf32, #tpu.memory_space<vmem>>, vector<8x32xf32>
    %c0_1 = arith.constant 0 : index
    %c0_2 = arith.constant 0 : index
    %1 = vector.load %arg3[%c0_1, %c0_2] : memref<8x1xf32, #tpu.memory_space<vmem>>, vector<8x1xf32>
    %c0_3 = arith.constant 0 : index
    %c0_4 = arith.constant 0 : index
    %c0_5 = arith.constant 0 : index
    %2 = vector.load %arg1[%c0_3, %c0_4, %c0_5] : memref<2x32x256xf32, #tpu.memory_space<vmem>>, vector<1x32x256xf32>
    %3 = vector.shape_cast %2 : vector<1x32x256xf32> to vector<32x256xf32>
    %cst = arith.constant dense<0.000000e+00> : vector<8x256xf32>
    %4 = tpu.matmul %0, %3, %cst {dimension_numbers = #tpu.dot_dimension_numbers<[1], [0], [0], [1], [0, 0, 1, 1], [], []>} : vector<8x32xf32>, vector<32x256xf32>, vector<8x256xf32> -> vector<8x256xf32>
    %5 = vector.broadcast %1 : vector<8x1xf32> to vector<8x256xf32>
    %6 = arith.addf %4, %5 : vector<8x256xf32>
    %cst_6 = arith.constant 0.000000e+00 : f32
    %7 = vector.broadcast %cst_6 : f32 to vector<8x256xf32>
    %8 = arith.maximumf %6, %7 : vector<8x256xf32>
    %c0_7 = arith.constant 0 : index
    %c0_8 = arith.constant 0 : index
    %9 = vector.load %arg10[%c0_7, %c0_8] : memref<8x512xf32, #tpu.memory_space<vmem>>, vector<8x256xf32>
    tpu.vector_store %arg10[%c0_7, %c0_8], %8 {strides = array<i32>} : memref<8x512xf32, #tpu.memory_space<vmem>>, vector<8x256xf32>,
    %c1 = arith.constant 1 : index
    %c0_9 = arith.constant 0 : index
    %c0_10 = arith.constant 0 : index
    %10 = vector.load %arg1[%c1, %c0_9, %c0_10] : memref<2x32x256xf32, #tpu.memory_space<vmem>>, vector<1x32x256xf32>
    %11 = vector.shape_cast %10 : vector<1x32x256xf32> to vector<32x256xf32>
    %cst_11 = arith.constant dense<0.000000e+00> : vector<8x256xf32>
    %12 = tpu.matmul %0, %11, %cst_11 {dimension_numbers = #tpu.dot_dimension_numbers<[1], [0], [0], [1], [0, 0, 1, 1], [], []>} : vector<8x32xf32>, vector<32x256xf32>, vector<8x256xf32> -> vector<8x256xf32>
    %13 = vector.broadcast %1 : vector<8x1xf32> to vector<8x256xf32>
    %14 = arith.addf %12, %13 : vector<8x256xf32>
    %cst_12 = arith.constant 0.000000e+00 : f32
    %15 = vector.broadcast %cst_12 : f32 to vector<8x256xf32>
    %16 = arith.maximumf %14, %15 : vector<8x256xf32>
    %c0_13 = arith.constant 0 : index
    %c256 = arith.constant 256 : index
    %17 = vector.load %arg10[%c0_13, %c256] : memref<8x512xf32, #tpu.memory_space<vmem>>, vector<8x256xf32>
    tpu.vector_store %arg10[%c0_13, %c256], %16 {strides = array<i32>} : memref<8x512xf32, #tpu.memory_space<vmem>>, vector<8x256xf32>,
    %c0_14 = arith.constant 0 : index
    %c0_15 = arith.constant 0 : index
    %18 = vector.load %arg10[%c0_14, %c0_15] : memref<8x512xf32, #tpu.memory_space<vmem>>, vector<8x512xf32>
    %c0_16 = arith.constant 0 : index
    %c0_17 = arith.constant 0 : index
    %19 = vector.load %arg8[%c0_16, %c0_17] : memref<8x512xf32, #tpu.memory_space<vmem>>, vector<8x512xf32>
    %c0_18 = arith.constant 0 : index
    %c0_19 = arith.constant 0 : index
    %c0_20 = arith.constant 0 : index
    %20 = vector.load %arg4[%c0_18, %c0_19, %c0_20] : memref<16x8x1xf32, #tpu.memory_space<vmem>>, vector<16x8x1xf32>
    %c0_21 = arith.constant 0 : index
    %c0_22 = arith.constant 0 : index
    %21 = vector.load %arg5[%c0_21, %c0_22] : memref<8x1xf32, #tpu.memory_space<vmem>>, vector<8x1xf32>
    %c1_i32 = arith.constant 1 : i32
    %22 = tpu.dynamic_rotate %18 by %c1_i32 dim 1 : vector<8x512xf32>, i32 -> vector<8x512xf32>
    %23 = vector.extract_strided_slice %19 {offsets = [2, 0], sizes = [1, 512], strides = [1, 1]} : vector<8x512xf32> to vector<1x512xf32>
    %24 = vector.broadcast %23 : vector<1x512xf32> to vector<8x512xf32>
    %25 = arith.mulf %22, %24 : vector<8x512xf32>
    %c511_i32 = arith.constant 511 : i32
    %26 = tpu.dynamic_rotate %18 by %c511_i32 dim 1 : vector<8x512xf32>, i32 -> vector<8x512xf32>
    %27 = vector.extract_strided_slice %19 {offsets = [3, 0], sizes = [1, 512], strides = [1, 1]} : vector<8x512xf32> to vector<1x512xf32>
    %28 = vector.broadcast %27 : vector<1x512xf32> to vector<8x512xf32>
    %29 = arith.mulf %26, %28 : vector<8x512xf32>
    %c16_i32 = arith.constant 16 : i32
    %30 = tpu.dynamic_rotate %18 by %c16_i32 dim 1 : vector<8x512xf32>, i32 -> vector<8x512xf32>
    %31 = vector.extract_strided_slice %19 {offsets = [0, 0], sizes = [1, 512], strides = [1, 1]} : vector<8x512xf32> to vector<1x512xf32>
    %32 = vector.broadcast %31 : vector<1x512xf32> to vector<8x512xf32>
    %33 = arith.mulf %30, %32 : vector<8x512xf32>
    %c17_i32 = arith.constant 17 : i32
    %34 = tpu.dynamic_rotate %18 by %c17_i32 dim 1 : vector<8x512xf32>, i32 -> vector<8x512xf32>
    %35 = vector.extract_strided_slice %19 {offsets = [4, 0], sizes = [1, 512], strides = [1, 1]} : vector<8x512xf32> to vector<1x512xf32>
    %36 = vector.broadcast %35 : vector<1x512xf32> to vector<8x512xf32>
    %37 = arith.mulf %34, %36 : vector<8x512xf32>
    %c15_i32 = arith.constant 15 : i32
    %38 = tpu.dynamic_rotate %18 by %c15_i32 dim 1 : vector<8x512xf32>, i32 -> vector<8x512xf32>
    %39 = vector.extract_strided_slice %19 {offsets = [5, 0], sizes = [1, 512], strides = [1, 1]} : vector<8x512xf32> to vector<1x512xf32>
    %40 = vector.broadcast %39 : vector<1x512xf32> to vector<8x512xf32>
    %41 = arith.mulf %38, %40 : vector<8x512xf32>
    %42 = vector.extract_strided_slice %20 {offsets = [5, 0, 0], sizes = [1, 8, 1], strides = [1, 1, 1]} : vector<16x8x1xf32> to vector<1x8x1xf32>
    %43 = vector.shape_cast %42 : vector<1x8x1xf32> to vector<8x1xf32>
    %44 = vector.broadcast %43 : vector<8x1xf32> to vector<8x512xf32>
    %45 = arith.mulf %18, %44 : vector<8x512xf32>
    %46 = vector.extract_strided_slice %20 {offsets = [7, 0, 0], sizes = [1, 8, 1], strides = [1, 1, 1]} : vector<16x8x1xf32> to vector<1x8x1xf32>
    %47 = vector.shape_cast %46 : vector<1x8x1xf32> to vector<8x1xf32>
    %48 = vector.broadcast %47 : vector<8x1xf32> to vector<8x512xf32>
    %49 = arith.mulf %25, %48 : vector<8x512xf32>
    %50 = arith.addf %45, %49 : vector<8x512xf32>
    %51 = vector.extract_strided_slice %20 {offsets = [13, 0, 0], sizes = [1, 8, 1], strides = [1, 1, 1]} : vector<16x8x1xf32> to vector<1x8x1xf32>
    %52 = vector.shape_cast %51 : vector<1x8x1xf32> to vector<8x1xf32>
    %53 = vector.broadcast %52 : vector<8x1xf32> to vector<8x512xf32>
    %54 = arith.mulf %33, %53 : vector<8x512xf32>
    %55 = arith.addf %50, %54 : vector<8x512xf32>
    %56 = vector.extract_strided_slice %20 {offsets = [15, 0, 0], sizes = [1, 8, 1], strides = [1, 1, 1]} : vector<16x8x1xf32> to vector<1x8x1xf32>
    %57 = vector.shape_cast %56 : vector<1x8x1xf32> to vector<8x1xf32>
    %58 = vector.broadcast %57 : vector<8x1xf32> to vector<8x512xf32>
    %59 = arith.mulf %37, %58 : vector<8x512xf32>
    %60 = arith.addf %55, %59 : vector<8x512xf32>
    %61 = vector.broadcast %21 : vector<8x1xf32> to vector<8x512xf32>
    %62 = arith.addf %60, %61 : vector<8x512xf32>
    %cst_23 = arith.constant 0.000000e+00 : f32
    %63 = vector.broadcast %cst_23 : f32 to vector<8x512xf32>
    %64 = arith.maximumf %62, %63 : vector<8x512xf32>
    %c0_24 = arith.constant 0 : index
    %c0_25 = arith.constant 0 : index
    %65 = vector.load %arg11[%c0_24, %c0_25] : memref<8x2048xf32, #tpu.memory_space<vmem>>, vector<8x512xf32>
    tpu.vector_store %arg11[%c0_24, %c0_25], %64 {strides = array<i32>} : memref<8x2048xf32, #tpu.memory_space<vmem>>, vector<8x512xf32>,
    %66 = vector.extract_strided_slice %20 {offsets = [6, 0, 0], sizes = [1, 8, 1], strides = [1, 1, 1]} : vector<16x8x1xf32> to vector<1x8x1xf32>
    %67 = vector.shape_cast %66 : vector<1x8x1xf32> to vector<8x1xf32>
    %68 = vector.broadcast %67 : vector<8x1xf32> to vector<8x512xf32>
    %69 = arith.mulf %18, %68 : vector<8x512xf32>
    %70 = vector.extract_strided_slice %20 {offsets = [4, 0, 0], sizes = [1, 8, 1], strides = [1, 1, 1]} : vector<16x8x1xf32> to vector<1x8x1xf32>
    %71 = vector.shape_cast %70 : vector<1x8x1xf32> to vector<8x1xf32>
    %72 = vector.broadcast %71 : vector<8x1xf32> to vector<8x512xf32>
    %73 = arith.mulf %29, %72 : vector<8x512xf32>
    %74 = arith.addf %69, %73 : vector<8x512xf32>
    %75 = vector.extract_strided_slice %20 {offsets = [14, 0, 0], sizes = [1, 8, 1], strides = [1, 1, 1]} : vector<16x8x1xf32> to vector<1x8x1xf32>
    %76 = vector.shape_cast %75 : vector<1x8x1xf32> to vector<8x1xf32>
    %77 = vector.broadcast %76 : vector<8x1xf32> to vector<8x512xf32>
    %78 = arith.mulf %33, %77 : vector<8x512xf32>
    %79 = arith.addf %74, %78 : vector<8x512xf32>
    %80 = vector.extract_strided_slice %20 {offsets = [12, 0, 0], sizes = [1, 8, 1], strides = [1, 1, 1]} : vector<16x8x1xf32> to vector<1x8x1xf32>
    %81 = vector.shape_cast %80 : vector<1x8x1xf32> to vector<8x1xf32>
    %82 = vector.broadcast %81 : vector<8x1xf32> to vector<8x512xf32>
    %83 = arith.mulf %41, %82 : vector<8x512xf32>
    %84 = arith.addf %79, %83 : vector<8x512xf32>
    %85 = vector.broadcast %21 : vector<8x1xf32> to vector<8x512xf32>
    %86 = arith.addf %84, %85 : vector<8x512xf32>
    %cst_26 = arith.constant 0.000000e+00 : f32
    %87 = vector.broadcast %cst_26 : f32 to vector<8x512xf32>
    %88 = arith.maximumf %86, %87 : vector<8x512xf32>
    %c0_27 = arith.constant 0 : index
    %c512 = arith.constant 512 : index
    %89 = vector.load %arg11[%c0_27, %c512] : memref<8x2048xf32, #tpu.memory_space<vmem>>, vector<8x512xf32>
    tpu.vector_store %arg11[%c0_27, %c512], %88 {strides = array<i32>} : memref<8x2048xf32, #tpu.memory_space<vmem>>, vector<8x512xf32>,
    %c496_i32 = arith.constant 496 : i32
    %90 = tpu.dynamic_rotate %18 by %c496_i32 dim 1 : vector<8x512xf32>, i32 -> vector<8x512xf32>
    %91 = vector.extract_strided_slice %19 {offsets = [1, 0], sizes = [1, 512], strides = [1, 1]} : vector<8x512xf32> to vector<1x512xf32>
    %92 = vector.broadcast %91 : vector<1x512xf32> to vector<8x512xf32>
    %93 = arith.mulf %90, %92 : vector<8x512xf32>
    %c497_i32 = arith.constant 497 : i32
    %94 = tpu.dynamic_rotate %18 by %c497_i32 dim 1 : vector<8x512xf32>, i32 -> vector<8x512xf32>
    %95 = vector.extract_strided_slice %19 {offsets = [6, 0], sizes = [1, 512], strides = [1, 1]} : vector<8x512xf32> to vector<1x512xf32>
    %96 = vector.broadcast %95 : vector<1x512xf32> to vector<8x512xf32>
    %97 = arith.mulf %94, %96 : vector<8x512xf32>
    %c495_i32 = arith.constant 495 : i32
    %98 = tpu.dynamic_rotate %18 by %c495_i32 dim 1 : vector<8x512xf32>, i32 -> vector<8x512xf32>
    %99 = vector.extract_strided_slice %19 {offsets = [7, 0], sizes = [1, 512], strides = [1, 1]} : vector<8x512xf32> to vector<1x512xf32>
    %100 = vector.broadcast %99 : vector<1x512xf32> to vector<8x512xf32>
    %101 = arith.mulf %98, %100 : vector<8x512xf32>
    %102 = vector.extract_strided_slice %20 {offsets = [9, 0, 0], sizes = [1, 8, 1], strides = [1, 1, 1]} : vector<16x8x1xf32> to vector<1x8x1xf32>
    %103 = vector.shape_cast %102 : vector<1x8x1xf32> to vector<8x1xf32>
    %104 = vector.broadcast %103 : vector<8x1xf32> to vector<8x512xf32>
    %105 = arith.mulf %18, %104 : vector<8x512xf32>
    %106 = vector.extract_strided_slice %20 {offsets = [11, 0, 0], sizes = [1, 8, 1], strides = [1, 1, 1]} : vector<16x8x1xf32> to vector<1x8x1xf32>
    %107 = vector.shape_cast %106 : vector<1x8x1xf32> to vector<8x1xf32>
    %108 = vector.broadcast %107 : vector<8x1xf32> to vector<8x512xf32>
    %109 = arith.mulf %25, %108 : vector<8x512xf32>
    %110 = arith.addf %105, %109 : vector<8x512xf32>
    %111 = vector.extract_strided_slice %20 {offsets = [1, 0, 0], sizes = [1, 8, 1], strides = [1, 1, 1]} : vector<16x8x1xf32> to vector<1x8x1xf32>
    %112 = vector.shape_cast %111 : vector<1x8x1xf32> to vector<8x1xf32>
    %113 = vector.broadcast %112 : vector<8x1xf32> to vector<8x512xf32>
    %114 = arith.mulf %93, %113 : vector<8x512xf32>
    %115 = arith.addf %110, %114 : vector<8x512xf32>
    %116 = vector.extract_strided_slice %20 {offsets = [3, 0, 0], sizes = [1, 8, 1], strides = [1, 1, 1]} : vector<16x8x1xf32> to vector<1x8x1xf32>
    %117 = vector.shape_cast %116 : vector<1x8x1xf32> to vector<8x1xf32>
    %118 = vector.broadcast %117 : vector<8x1xf32> to vector<8x512xf32>
    %119 = arith.mulf %97, %118 : vector<8x512xf32>
    %120 = arith.addf %115, %119 : vector<8x512xf32>
    %121 = vector.broadcast %21 : vector<8x1xf32> to vector<8x512xf32>
    %122 = arith.addf %120, %121 : vector<8x512xf32>
    %cst_28 = arith.constant 0.000000e+00 : f32
    %123 = vector.broadcast %cst_28 : f32 to vector<8x512xf32>
    %124 = arith.maximumf %122, %123 : vector<8x512xf32>
    %c0_29 = arith.constant 0 : index
    %c1024 = arith.constant 1024 : index
    %125 = vector.load %arg11[%c0_29, %c1024] : memref<8x2048xf32, #tpu.memory_space<vmem>>, vector<8x512xf32>
    tpu.vector_store %arg11[%c0_29, %c1024], %124 {strides = array<i32>} : memref<8x2048xf32, #tpu.memory_space<vmem>>, vector<8x512xf32>,
    %126 = vector.extract_strided_slice %20 {offsets = [10, 0, 0], sizes = [1, 8, 1], strides = [1, 1, 1]} : vector<16x8x1xf32> to vector<1x8x1xf32>
    %127 = vector.shape_cast %126 : vector<1x8x1xf32> to vector<8x1xf32>
    %128 = vector.broadcast %127 : vector<8x1xf32> to vector<8x512xf32>
    %129 = arith.mulf %18, %128 : vector<8x512xf32>
    %130 = vector.extract_strided_slice %20 {offsets = [8, 0, 0], sizes = [1, 8, 1], strides = [1, 1, 1]} : vector<16x8x1xf32> to vector<1x8x1xf32>
    %131 = vector.shape_cast %130 : vector<1x8x1xf32> to vector<8x1xf32>
    %132 = vector.broadcast %131 : vector<8x1xf32> to vector<8x512xf32>
    %133 = arith.mulf %29, %132 : vector<8x512xf32>
    %134 = arith.addf %129, %133 : vector<8x512xf32>
    %135 = vector.extract_strided_slice %20 {offsets = [2, 0, 0], sizes = [1, 8, 1], strides = [1, 1, 1]} : vector<16x8x1xf32> to vector<1x8x1xf32>
    %136 = vector.shape_cast %135 : vector<1x8x1xf32> to vector<8x1xf32>
    %137 = vector.broadcast %136 : vector<8x1xf32> to vector<8x512xf32>
    %138 = arith.mulf %93, %137 : vector<8x512xf32>
    %139 = arith.addf %134, %138 : vector<8x512xf32>
    %140 = vector.extract_strided_slice %20 {offsets = [0, 0, 0], sizes = [1, 8, 1], strides = [1, 1, 1]} : vector<16x8x1xf32> to vector<1x8x1xf32>
    %141 = vector.shape_cast %140 : vector<1x8x1xf32> to vector<8x1xf32>
    %142 = vector.broadcast %141 : vector<8x1xf32> to vector<8x512xf32>
    %143 = arith.mulf %101, %142 : vector<8x512xf32>
    %144 = arith.addf %139, %143 : vector<8x512xf32>
    %145 = vector.broadcast %21 : vector<8x1xf32> to vector<8x512xf32>
    %146 = arith.addf %144, %145 : vector<8x512xf32>
    %cst_30 = arith.constant 0.000000e+00 : f32
    %147 = vector.broadcast %cst_30 : f32 to vector<8x512xf32>
    %148 = arith.maximumf %146, %147 : vector<8x512xf32>
    %c0_31 = arith.constant 0 : index
    %c1536 = arith.constant 1536 : index
    %149 = vector.load %arg11[%c0_31, %c1536] : memref<8x2048xf32, #tpu.memory_space<vmem>>, vector<8x512xf32>
    tpu.vector_store %arg11[%c0_31, %c1536], %148 {strides = array<i32>} : memref<8x2048xf32, #tpu.memory_space<vmem>>, vector<8x512xf32>,
    %c0_32 = arith.constant 0 : index
    %c0_33 = arith.constant 0 : index
    %150 = vector.load %arg6[%c0_32, %c0_33] : memref<16x8xf32, #tpu.memory_space<vmem>>, vector<16x8xf32>
    %c0_34 = arith.constant 0 : index
    %c0_35 = arith.constant 0 : index
    %151 = vector.load %arg11[%c0_34, %c0_35] : memref<8x2048xf32, #tpu.memory_space<vmem>>, vector<8x2048xf32>
    %cst_36 = arith.constant dense<0.000000e+00> : vector<16x2048xf32>
    %152 = tpu.matmul %150, %151, %cst_36 {dimension_numbers = #tpu.dot_dimension_numbers<[1], [0], [0], [1], [0, 0, 1, 1], [], []>} : vector<16x8xf32>, vector<8x2048xf32>, vector<16x2048xf32> -> vector<16x2048xf32>
    %c0_37 = arith.constant 0 : index
    %c0_38 = arith.constant 0 : index
    %153 = vector.load %arg7[%c0_37, %c0_38] : memref<16x1xf32, #tpu.memory_space<vmem>>, vector<16x1xf32>
    %154 = vector.broadcast %153 : vector<16x1xf32> to vector<16x2048xf32>
    %155 = arith.addf %152, %154 : vector<16x2048xf32>
    %cst_39 = arith.constant 0.000000e+00 : f32
    %156 = vector.broadcast %cst_39 : f32 to vector<16x2048xf32>
    %157 = arith.maximumf %155, %156 : vector<16x2048xf32>
    %c0_40 = arith.constant 0 : index
    %c0_41 = arith.constant 0 : index
    %c0_42 = arith.constant 0 : index
    %158 = vector.load %arg9[%c0_40, %c0_41, %c0_42] : memref<1x16x2048xf32, #tpu.memory_space<vmem>>, vector<1x16x2048xf32>
    %159 = vector.shape_cast %158 : vector<1x16x2048xf32> to vector<16x2048xf32>
    %160 = vector.shape_cast %157 : vector<16x2048xf32> to vector<1x16x2048xf32>
    tpu.vector_store %arg9[%c0_40, %c0_41, %c0_42], %160 {strides = array<i32>} : memref<1x16x2048xf32, #tpu.memory_space<vmem>>, vector<1x16x2048xf32>,
    return
  }
  func.func @transform_0(%arg0: i32) -> (i32, i32, i32) {
    %c0_i32 = arith.constant 0 : i32
    %c0_i32_0 = arith.constant 0 : i32
    %c0_i32_1 = arith.constant 0 : i32
    return %arg0, %c0_i32, %c0_i32_0 : i32, i32, i32
  }
  func.func @transform_1(%arg0: i32) -> (i32, i32) {
    %c0_i32 = arith.constant 0 : i32
    %c0_i32_0 = arith.constant 0 : i32
    %c0_i32_1 = arith.constant 0 : i32
    return %c0_i32, %c0_i32_0 : i32, i32
  }
  func.func @transform_2(%arg0: i32) -> (i32, i32) {
    %c0_i32 = arith.constant 0 : i32
    %c0_i32_0 = arith.constant 0 : i32
    %c0_i32_1 = arith.constant 0 : i32
    return %c0_i32, %c0_i32_0 : i32, i32
  }
  func.func @transform_3(%arg0: i32) -> (i32, i32, i32) {
    %c0_i32 = arith.constant 0 : i32
    %c0_i32_0 = arith.constant 0 : i32
    %c0_i32_1 = arith.constant 0 : i32
    %c0_i32_2 = arith.constant 0 : i32
    return %c0_i32, %c0_i32_0, %c0_i32_1 : i32, i32, i32
  }
  func.func @transform_4(%arg0: i32) -> (i32, i32) {
    %c0_i32 = arith.constant 0 : i32
    %c0_i32_0 = arith.constant 0 : i32
    %c0_i32_1 = arith.constant 0 : i32
    return %c0_i32, %c0_i32_0 : i32, i32
  }
  func.func @transform_5(%arg0: i32) -> (i32, i32) {
    %c0_i32 = arith.constant 0 : i32
    %c0_i32_0 = arith.constant 0 : i32
    %c0_i32_1 = arith.constant 0 : i32
    return %c0_i32, %c0_i32_0 : i32, i32
  }
  func.func @transform_6(%arg0: i32) -> (i32, i32) {
    %c0_i32 = arith.constant 0 : i32
    %c0_i32_0 = arith.constant 0 : i32
    %c0_i32_1 = arith.constant 0 : i32
    return %c0_i32, %c0_i32_0 : i32, i32
  }
  func.func @transform_7(%arg0: i32) -> (i32, i32) {
    %c0_i32 = arith.constant 0 : i32
    %c0_i32_0 = arith.constant 0 : i32
    %c0_i32_1 = arith.constant 0 : i32
    return %c0_i32, %c0_i32_0 : i32, i32
  }
  func.func @transform_8(%arg0: i32) -> (i32, i32, i32) {
    %c0_i32 = arith.constant 0 : i32
    %c0_i32_0 = arith.constant 0 : i32
    %c0_i32_1 = arith.constant 0 : i32
    return %arg0, %c0_i32, %c0_i32_0 : i32, i32, i32
  }
}

</mosaic_0001>

<llo_original>
// kernel: tpu_custom_call.1
$region0: #{tpu_custom_call.1}
  #allocation0 [shape = 'u32[]', space=smem, size = 0x4, offset = 0x4, fixed_abs, tag = 'smem constant byte address 0x4 - core index']
  #allocation1 [shape = 'u32[144,128]{1,0:T(1,128)}', space=vmem, size = 0x12000, scoped, tag = 'internal scratch']
  #allocation2 [shape = 'f32[8,512]{1,0:T(8,128)}', space=vmem, size = 0x4000, scoped, tag = 'scratch operand']
  #allocation3 [shape = 'f32[8,2048]{1,0:T(8,128)}', space=vmem, size = 0x10000, scoped, tag = 'scratch operand']
  %s0 = inlined_call_operand.hbm [shape: f32[4,32,256], index: 0, kind: input, shape index: {}]
  %s1 = inlined_call_operand.vmem [shape: f32[8,32], index: 1, kind: input, shape index: {}]
  %s2 = inlined_call_operand.vmem [shape: f32[8,1], index: 2, kind: input, shape index: {}]
  %s3 = inlined_call_operand.vmem [shape: f32[16,8,1], index: 3, kind: input, shape index: {}]
  %s4 = inlined_call_operand.vmem [shape: f32[8,1], index: 4, kind: input, shape index: {}]
  %s5 = inlined_call_operand.vmem [shape: f32[16,8], index: 5, kind: input, shape index: {}]
  %s6 = inlined_call_operand.vmem [shape: f32[16,1], index: 6, kind: input, shape index: {}]
  %s7 = inlined_call_operand.vmem [shape: f32[8,512], index: 7, kind: input, shape index: {}]
  %s8 = inlined_call_operand.hbm [shape: f32[2,16,2048], index: 8, kind: output, shape index: {}]
  %s9 = sld [smem:[#allocation0]]
  $region69: #{tpu_custom_call.1} parent=0
    _
  %s11 = ssub.s32 1, %s9
  %s12 = scalar_select 0, %s11, %s9
  $region1: #{tpu_custom_call.1} parent=0
    #allocation4 [shape = 'u8[131072]{0}', space=vmem, size = 0x20000, scoped, tag = 'input window, operand 0']
    #allocation5 [shape = 's32[2]{0}', space=sflag, size = 0x8, scoped, tag = 'scoped memory for tpu_custom_call.1']
    #allocation6 [shape = 's32[2]{0}', space=sflag, size = 0x8, scoped, tag = 'scoped memory for tpu_custom_call.1']
    #allocation7 [shape = 'u8[262144]{0}', space=vmem, size = 0x40000, scoped, tag = 'output window, operand 0']
    %13 = vsyncpa [#allocation5], 0
    %s14 = scalar_lea.sflag [#allocation5], 1
    %15 = vsyncpa %s14, 0
    %16 = vsyncpa [#allocation6], 0
    %s17 = scalar_lea.sflag [#allocation6], 1
    %18 = vsyncpa %s17, 0
    loop: start=0, step=1, limit=4
    $region2: #{tpu_custom_call.1} parent=1 // loop_pre_header
      _
    $region3: #{tpu_custom_call.1} parent=1 // loop_header
      %s20 = sphi 0, %s24
      %p21 = scmp.ge.s32.totalorder %s20, 4
      %s30 = sphi 0, %s32
      %s33 = sphi 0, %s30
      %s34 = sphi 0, %s33
      %s50 = sphi 0, %s34
      %s54 = sphi 0, %s54
      %s56 = sphi 0, %s54
      %s57 = sphi 0, %s56
      %s71 = sphi 0, %s57
      %s75 = sphi 0, %s75
      %s77 = sphi 0, %s75
      %s78 = sphi 0, %s77
      %s92 = sphi 0, %s78
      %s96 = sphi 0, %s96
      %s98 = sphi 0, %s96
      %s99 = sphi 0, %s98
      %s113 = sphi 0, %s99
      %s117 = sphi 0, %s117
      %s119 = sphi 0, %s117
      %s120 = sphi 0, %s119
      %s134 = sphi 0, %s120
      %s138 = sphi 0, %s138
      %s140 = sphi 0, %s138
      %s141 = sphi 0, %s140
      %s155 = sphi 0, %s141
      %s159 = sphi 0, %s159
      %s161 = sphi 0, %s159
      %s162 = sphi 0, %s161
      %s176 = sphi 0, %s162
      %s180 = sphi 0, %s180
      %s182 = sphi 0, %s180
      %s183 = sphi 0, %s182
      %s197 = sphi 0, %s183
      %s203 = sphi 0, %s205
      %s206 = sphi 0, %s203
      %s207 = sphi 0, %s206
      %s223 = sphi 0, %s207
    $region4: #{tpu_custom_call.1} parent=1 // loop_header_branch
      %23 = sbr.rel (%p21) target = $region8
    $region5: #{tpu_custom_call.1} parent=1 // loop_body
      %s25 = ssub.s32 %s20, 1
      %s26 = ssub.s32 %s20, 2
      %s27 = sadd.s32 %s20, 1
      %s28 = ssub.s32 %s20, %s27
      %p29 = scmp.eq.s32.totalorder %s28, 0
      %s31 = sadd.s32 %s30, 1
      %s32 = scalar_select %p29, %s30, %s31
      %p35 = pneg %p29
      %p36 = scmp.eq.s32.totalorder %s20, 1
      %p37 = por %p35, %p36
      %p38 = scmp.ne.s32.totalorder %s30, %s33
      %p39 = scmp.eq.s32.totalorder %s20, 0
      %p40 = por %p38, %p39
      %p41 = scmp.ne.s32.totalorder %s30, %s33
      %p42 = scmp.eq.s32.totalorder %s25, 1
      %p43 = por %p41, %p42
      %p44 = scmp.ne.s32.totalorder %s33, %s34
      %p45 = scmp.eq.s32.totalorder %s25, 0
      %p46 = por %p44, %p45
      %p47 = scmp.ne.s32.totalorder %s33, %s34
      %p48 = scmp.eq.s32.totalorder %s26, 1
      %p49 = por %p47, %p48
      %p51 = scmp.ne.s32.totalorder %s34, %s50
      %p52 = scmp.eq.s32.totalorder %s26, 0
      %p53 = por %p51, %p52
      %s55 = sadd.s32 %s54, 1
      %p58 = scmp.eq.s32.totalorder %s20, 1
      %p59 = scmp.ne.s32.totalorder %s54, %s56
      %p60 = scmp.eq.s32.totalorder %s20, 0
      %p61 = por %p59, %p60
      %p62 = scmp.ne.s32.totalorder %s54, %s56
      %p63 = scmp.eq.s32.totalorder %s25, 1
      %p64 = por %p62, %p63
      %p65 = scmp.ne.s32.totalorder %s56, %s57
      %p66 = scmp.eq.s32.totalorder %s25, 0
      %p67 = por %p65, %p66
      %p68 = scmp.ne.s32.totalorder %s56, %s57
      %p69 = scmp.eq.s32.totalorder %s26, 1
      %p70 = por %p68, %p69
      %p72 = scmp.ne.s32.totalorder %s57, %s71
      %p73 = scmp.eq.s32.totalorder %s26, 0
      %p74 = por %p72, %p73
      %s76 = sadd.s32 %s75, 1
      %p79 = scmp.eq.s32.totalorder %s20, 1
      %p80 = scmp.ne.s32.totalorder %s75, %s77
      %p81 = scmp.eq.s32.totalorder %s20, 0
      %p82 = por %p80, %p81
      %p83 = scmp.ne.s32.totalorder %s75, %s77
      %p84 = scmp.eq.s32.totalorder %s25, 1
      %p85 = por %p83, %p84
      %p86 = scmp.ne.s32.totalorder %s77, %s78
      %p87 = scmp.eq.s32.totalorder %s25, 0
      %p88 = por %p86, %p87
      %p89 = scmp.ne.s32.totalorder %s77, %s78
      %p90 = scmp.eq.s32.totalorder %s26, 1
      %p91 = por %p89, %p90
      %p93 = scmp.ne.s32.totalorder %s78, %s92
      %p94 = scmp.eq.s32.totalorder %s26, 0
      %p95 = por %p93, %p94
      %s97 = sadd.s32 %s96, 1
      %p100 = scmp.eq.s32.totalorder %s20, 1
      %p101 = scmp.ne.s32.totalorder %s96, %s98
      %p102 = scmp.eq.s32.totalorder %s20, 0
      %p103 = por %p101, %p102
      %p104 = scmp.ne.s32.totalorder %s96, %s98
      %p105 = scmp.eq.s32.totalorder %s25, 1
      %p106 = por %p104, %p105
      %p107 = scmp.ne.s32.totalorder %s98, %s99
      %p108 = scmp.eq.s32.totalorder %s25, 0
      %p109 = por %p107, %p108
      %p110 = scmp.ne.s32.totalorder %s98, %s99
      %p111 = scmp.eq.s32.totalorder %s26, 1
      %p112 = por %p110, %p111
      %p114 = scmp.ne.s32.totalorder %s99, %s113
      %p115 = scmp.eq.s32.totalorder %s26, 0
      %p116 = por %p114, %p115
      %s118 = sadd.s32 %s117, 1
      %p121 = scmp.eq.s32.totalorder %s20, 1
      %p122 = scmp.ne.s32.totalorder %s117, %s119
      %p123 = scmp.eq.s32.totalorder %s20, 0
      %p124 = por %p122, %p123
      %p125 = scmp.ne.s32.totalorder %s117, %s119
      %p126 = scmp.eq.s32.totalorder %s25, 1
      %p127 = por %p125, %p126
      %p128 = scmp.ne.s32.totalorder %s119, %s120
      %p129 = scmp.eq.s32.totalorder %s25, 0
      %p130 = por %p128, %p129
      %p131 = scmp.ne.s32.totalorder %s119, %s120
      %p132 = scmp.eq.s32.totalorder %s26, 1
      %p133 = por %p131, %p132
      %p135 = scmp.ne.s32.totalorder %s120, %s134
      %p136 = scmp.eq.s32.totalorder %s26, 0
      %p137 = por %p135, %p136
      %s139 = sadd.s32 %s138, 1
      %p142 = scmp.eq.s32.totalorder %s20, 1
      %p143 = scmp.ne.s32.totalorder %s138, %s140
      %p144 = scmp.eq.s32.totalorder %s20, 0
      %p145 = por %p143, %p144
      %p146 = scmp.ne.s32.totalorder %s138, %s140
      %p147 = scmp.eq.s32.totalorder %s25, 1
      %p148 = por %p146, %p147
      %p149 = scmp.ne.s32.totalorder %s140, %s141
      %p150 = scmp.eq.s32.totalorder %s25, 0
      %p151 = por %p149, %p150
      %p152 = scmp.ne.s32.totalorder %s140, %s141
      %p153 = scmp.eq.s32.totalorder %s26, 1
      %p154 = por %p152, %p153
      %p156 = scmp.ne.s32.totalorder %s141, %s155
      %p157 = scmp.eq.s32.totalorder %s26, 0
      %p158 = por %p156, %p157
      %s160 = sadd.s32 %s159, 1
      %p163 = scmp.eq.s32.totalorder %s20, 1
      %p164 = scmp.ne.s32.totalorder %s159, %s161
      %p165 = scmp.eq.s32.totalorder %s20, 0
      %p166 = por %p164, %p165
      %p167 = scmp.ne.s32.totalorder %s159, %s161
      %p168 = scmp.eq.s32.totalorder %s25, 1
      %p169 = por %p167, %p168
      %p170 = scmp.ne.s32.totalorder %s161, %s162
      %p171 = scmp.eq.s32.totalorder %s25, 0
      %p172 = por %p170, %p171
      %p173 = scmp.ne.s32.totalorder %s161, %s162
      %p174 = scmp.eq.s32.totalorder %s26, 1
      %p175 = por %p173, %p174
      %p177 = scmp.ne.s32.totalorder %s162, %s176
      %p178 = scmp.eq.s32.totalorder %s26, 0
      %p179 = por %p177, %p178
      %s181 = sadd.s32 %s180, 1
      %p184 = scmp.eq.s32.totalorder %s20, 1
      %p185 = scmp.ne.s32.totalorder %s180, %s182
      %p186 = scmp.eq.s32.totalorder %s20, 0
      %p187 = por %p185, %p186
      %p188 = scmp.ne.s32.totalorder %s180, %s182
      %p189 = scmp.eq.s32.totalorder %s25, 1
      %p190 = por %p188, %p189
      %p191 = scmp.ne.s32.totalorder %s182, %s183
      %p192 = scmp.eq.s32.totalorder %s25, 0
      %p193 = por %p191, %p192
      %p194 = scmp.ne.s32.totalorder %s182, %s183
      %p195 = scmp.eq.s32.totalorder %s26, 1
      %p196 = por %p194, %p195
      %p198 = scmp.ne.s32.totalorder %s183, %s197
      %p199 = scmp.eq.s32.totalorder %s26, 0
      %p200 = por %p198, %p199
      %s201 = ssub.s32 %s20, %s27
      %p202 = scmp.eq.s32.totalorder %s201, 0
      %s204 = sadd.s32 %s203, 1
      %s205 = scalar_select %p202, %s203, %s204
      %p208 = pneg %p202
      %p209 = scmp.eq.s32.totalorder %s20, 1
      %p210 = por %p208, %p209
      %p211 = scmp.ne.s32.totalorder %s203, %s206
      %p212 = scmp.eq.s32.totalorder %s20, 0
      %p213 = por %p211, %p212
      %p214 = scmp.ne.s32.totalorder %s203, %s206
      %p215 = scmp.eq.s32.totalorder %s25, 1
      %p216 = por %p214, %p215
      %p217 = scmp.ne.s32.totalorder %s206, %s207
      %p218 = scmp.eq.s32.totalorder %s25, 0
      %p219 = por %p217, %p218
      %p220 = scmp.ne.s32.totalorder %s206, %s207
      %p221 = scmp.eq.s32.totalorder %s26, 1
      %p222 = por %p220, %p221
      %p224 = scmp.ne.s32.totalorder %s207, %s223
      %p225 = scmp.eq.s32.totalorder %s26, 0
      %p226 = por %p224, %p225
      %p227 = scmp.le.s32.totalorder 1, %s20
      %p228 = scmp.lt.s32.totalorder %s20, 3
      %p229 = pnand %p227, %p228
      %p230 = pneg %p229
      // Predicated region
      $region9: #{tpu_custom_call.1} parent=5 // pred_check
        _
      $region10: #{tpu_custom_call.1} parent=5 // pred_check_branch
        %232 = sbr.rel (%p229) target = $region12
      $region11: #{tpu_custom_call.1} parent=5 // pred_region
        %s233 = ssub.s32 %s20, 1
        // Predicated region
        $region13: #{tpu_custom_call.1} parent=11 // pred_check
          %p234 = pneg %p67
        $region14: #{tpu_custom_call.1} parent=11 // pred_check_branch
          %236 = sbr.rel (%p234) target = $region16
        $region15: #{tpu_custom_call.1} parent=11 // pred_region
          _
        $region16: #{tpu_custom_call.1} parent=11 // pred_fallthru
          _
        // Predicated region
        $region17: #{tpu_custom_call.1} parent=11 // pred_check
          %p237 = pneg %p88
        $region18: #{tpu_custom_call.1} parent=11 // pred_check_branch
          %239 = sbr.rel (%p237) target = $region20
        $region19: #{tpu_custom_call.1} parent=11 // pred_region
          _
        $region20: #{tpu_custom_call.1} parent=11 // pred_fallthru
          _
        // Predicated region
        $region21: #{tpu_custom_call.1} parent=11 // pred_check
          %p240 = pneg %p109
        $region22: #{tpu_custom_call.1} parent=11 // pred_check_branch
          %242 = sbr.rel (%p240) target = $region24
        $region23: #{tpu_custom_call.1} parent=11 // pred_region
          _
        $region24: #{tpu_custom_call.1} parent=11 // pred_fallthru
          _
        // Predicated region
        $region25: #{tpu_custom_call.1} parent=11 // pred_check
          %p243 = pneg %p130
        $region26: #{tpu_custom_call.1} parent=11 // pred_check_branch
          %245 = sbr.rel (%p243) target = $region28
        $region27: #{tpu_custom_call.1} parent=11 // pred_region
          _
        $region28: #{tpu_custom_call.1} parent=11 // pred_fallthru
          _
        // Predicated region
        $region29: #{tpu_custom_call.1} parent=11 // pred_check
          %p246 = pneg %p151
        $region30: #{tpu_custom_call.1} parent=11 // pred_check_branch
          %248 = sbr.rel (%p246) target = $region32
        $region31: #{tpu_custom_call.1} parent=11 // pred_region
          _
        $region32: #{tpu_custom_call.1} parent=11 // pred_fallthru
          _
        // Predicated region
        $region33: #{tpu_custom_call.1} parent=11 // pred_check
          %p249 = pneg %p172
        $region34: #{tpu_custom_call.1} parent=11 // pred_check_branch
          %251 = sbr.rel (%p249) target = $region36
        $region35: #{tpu_custom_call.1} parent=11 // pred_region
          _
        $region36: #{tpu_custom_call.1} parent=11 // pred_fallthru
          _
        // Predicated region
        $region37: #{tpu_custom_call.1} parent=11 // pred_check
          %p252 = pneg %p193
        $region38: #{tpu_custom_call.1} parent=11 // pred_check_branch
          %254 = sbr.rel (%p252) target = $region40
        $region39: #{tpu_custom_call.1} parent=11 // pred_region
          _
        $region40: #{tpu_custom_call.1} parent=11 // pred_fallthru
          _
      $region12: #{tpu_custom_call.1} parent=5 // pred_fallthru
        _
      %p255 = scmp.lt.s32.totalorder %s20, 2
      // Predicated region
      $region41: #{tpu_custom_call.1} parent=5 // pred_check
        %p256 = pneg %p255
      $region42: #{tpu_custom_call.1} parent=5 // pred_check_branch
        %258 = sbr.rel (%p256) target = $region44
      $region43: #{tpu_custom_call.1} parent=5 // pred_region
        // Predicated region
        $region45: #{tpu_custom_call.1} parent=43 // pred_check
          %p259 = pneg %p40
        $region46: #{tpu_custom_call.1} parent=43 // pred_check_branch
          %261 = sbr.rel (%p259) target = $region48
        $region47: #{tpu_custom_call.1} parent=43 // pred_region
          %s262 = sand.u32 %s30, 1
          %s263 = scalar_lea.sflag [#allocation5], %s262
          %s264 = sand.u32 %s30, 1
          %s265 = smul.addr %s264, 128
          %s266 = scalar_lea.vmem [#allocation4], %s265
          %s267 = smul.u32 2, %s20
          %s269 = ssub.s32 2048, 2048
          %270 = vsyncadd %s263, %s269
          %s271 = smul.addr %s267, 8
          %s272 = smul.addr %s271, 128
          %s273 = scalar_lea.hbm %s0, %s272
          %s274 = sshll.u32 %s266, 4
          %s275 = int_to_ptr.vmem [resolvable:$true] %s274
          %280 = dma.hbm_to_vmem [thread:$0]  %s273, 2048, %s275, %s263, 256, 256, 16
        $region48: #{tpu_custom_call.1} parent=43 // pred_fallthru
          _
      $region44: #{tpu_custom_call.1} parent=5 // pred_fallthru
        _
      %p281 = scmp.le.s32.totalorder 1, %s20
      %p282 = scmp.lt.s32.totalorder %s20, 3
      %p283 = pnand %p281, %p282
      %p284 = pneg %p283
      // Predicated region
      $region49: #{tpu_custom_call.1} parent=5 // pred_check
        _
      $region50: #{tpu_custom_call.1} parent=5 // pred_check_branch
        %286 = sbr.rel (%p283) target = $region52
      $region51: #{tpu_custom_call.1} parent=5 // pred_region
        %s287 = ssub.s32 %s20, 1
        %s288 = sand.u32 %s33, 1
        %s289 = scalar_lea.sflag [#allocation5], %s288
        %s290 = sand.u32 %s33, 1
        %s291 = smul.addr %s290, 128
        %s292 = scalar_lea.vmem [#allocation4], %s291
        // Predicated region
        $region53: #{tpu_custom_call.1} parent=51 // pred_check
          %p293 = pneg %p46
        $region54: #{tpu_custom_call.1} parent=51 // pred_check_branch
          %295 = sbr.rel (%p293) target = $region56
        $region55: #{tpu_custom_call.1} parent=51 // pred_region
          %296 = dma.done %s289, 2048
        $region56: #{tpu_custom_call.1} parent=51 // pred_fallthru
          _
        %s297 = sand.u32 %s33, 1
        %s298 = scalar_lea.sflag [#allocation5], %s297
        %s299 = sand.u32 %s33, 1
        %s300 = smul.addr %s299, 128
        %s301 = scalar_lea.vmem [#allocation4], %s300
        %p302 = pneg %p46
        %p303 = pneg %p43
        %p304 = pneg %p67
        %p305 = pneg %p64
        %p306 = pneg %p88
        %p307 = pneg %p85
        %p308 = pneg %p109
        %p309 = pneg %p106
        %p310 = pneg %p130
        %p311 = pneg %p127
        %p312 = pneg %p151
        %p313 = pneg %p148
        %p314 = pneg %p172
        %p315 = pneg %p169
        %p316 = pneg %p193
        %p317 = pneg %p190
        %p318 = pneg %p219
        %p319 = pneg %p216
        %s320 = sand.u32 %s206, 1
        %s321 = scalar_lea.sflag [#allocation6], %s320
        %s322 = sand.u32 %s206, 1
        %s323 = smul.addr %s322, 256
        %s324 = scalar_lea.vmem [#allocation7], %s323
        %s325 = smul.u32 2, %s25
        %v326 = vld [vmem:[%s1] sm:$0xff]
        %v327 = vld [vmem:[%s2] sm:$0xff]
        %v328 = vld [vmem:[%s292] sm:$0xff]
        %v329 = vld [vmem:[%s292 + $0x8] sm:$0xff]
        %v330 = vld [vmem:[%s292 + $0x10] sm:$0xff]
        %v331 = vld [vmem:[%s292 + $0x18] sm:$0xff]
        %v332 = vld [vmem:[%s292 + $0x20] sm:$0xff]
        %v333 = vld [vmem:[%s292 + $0x28] sm:$0xff]
        %v334 = vld [vmem:[%s292 + $0x30] sm:$0xff]
        %v335 = vld [vmem:[%s292 + $0x38] sm:$0xff]
        %337 = vset.pattern.permute.xlu0 0
        %338 = vperm.xlu0 %337, %v327
        %v339 = vpop.permute.xlu0 %338
        %vm341 = vcmask 261120
        %v343 = vsel %vm341, %v326, 0
        %345 = vmatprep.subr.mxu0 %v329
        %346 = vmatpush1.msra.mxu0 %v328
        %347 = vmatprep.subr.mxu0 %v331
        %348 = vmatpush1.msra.mxu0 %v330
        %349 = vmatprep.subr.mxu0 %v333
        %350 = vmatpush1.msra.mxu0 %v332
        %351 = vmatprep.subr.mxu0 %v335
        %352 = vmatpush1.msra.mxu0 %v334
        %353 = vmatprep.subr.mxu0 0.0
        %354 = vmatpush1.msra.mxu0 0.0
        %355 = vmatprep.subr.mxu0 0.0
        %356 = vmatpush1.msra.mxu0 0.0
        %357 = vmatprep.subr.mxu0 0.0
        %358 = vmatpush1.msra.mxu0 0.0
        %359 = vmatprep.subr.mxu0 0.0
        %360 = vmatpush1.msra.mxu0 0.0
        %361 = vmatprep.subr.mxu0 0.0
        %362 = vmatpush1.msra.mxu0 0.0
        %363 = vmatprep.subr.mxu0 0.0
        %364 = vmatpush1.msra.mxu0 0.0
        %365 = vmatprep.subr.mxu0 0.0
        %366 = vmatpush1.msra.mxu0 0.0
        %367 = vmatprep.subr.mxu0 0.0
        %368 = vmatpush1.msra.mxu0 0.0
        %369 = vmatprep.subr.mxu0 0.0
        %370 = vmatpush1.msra.mxu0 0.0
        %371 = vmatprep.subr.mxu0 0.0
        %372 = vmatpush1.msra.mxu0 0.0
        %373 = vmatprep.subr.mxu0 0.0
        %374 = vmatpush1.msra.mxu0 0.0
        %375 = vmatprep.subr.mxu0 0.0
        %376 = vmatpush1.msra.mxu0 0.0
        %377 = vmatprep.subr.mxu0 0.0
        %378 = vmatpush1.msra.mxu0 0.0
        %379 = vmatprep.subr.mxu0 0.0
        %380 = vmatpush1.msra.mxu0 0.0
        %381 = vmatprep.subr.mxu0 0.0
        %382 = vmatpush1.msra.mxu0 0.0
        %383 = vmatprep.subr.mxu0 0.0
        %384 = vmatpush1.msra.mxu0 0.0
        %385 = vmatprep.subr.mxu0 0.0
        %386 = vmatpush1.msra.mxu0 0.0
        %387 = vmatprep.subr.mxu0 0.0
        %388 = vmatpush1.msra.mxu0 0.0
        %389 = vmatprep.subr.mxu0 0.0
        %390 = vmatpush1.msra.mxu0 0.0
        %391 = vmatprep.subr.mxu0 0.0
        %392 = vmatpush1.msra.mxu0 0.0
        %393 = vmatprep.subr.mxu0 0.0
        %394 = vmatpush1.msra.mxu0 0.0
        %395 = vmatprep.subr.mxu0 0.0
        %396 = vmatpush1.msra.mxu0 0.0
        %397 = vmatprep.subr.mxu0 0.0
        %398 = vmatpush1.msra.mxu0 0.0
        %399 = vmatprep.subr.mxu0 0.0
        %400 = vmatpush1.msra.mxu0 0.0
        %401 = vmatprep.subr.mxu0 0.0
        %402 = vmatpush1.msra.mxu0 0.0
        %403 = vmatprep.subr.mxu0 0.0
        %404 = vmatpush1.msra.mxu0 0.0
        %405 = vmatprep.subr.mxu0 0.0
        %406 = vmatpush1.msra.mxu0 0.0
        %407 = vmatprep.subr.mxu0 0.0
        %408 = vmatpush1.msra.mxu0 0.0
        %409 = vmatprep.mubr.f32.mxu0 0.0
        %410 = vmatmul.mubr.f32.gmra.mrb[0].mxu0 %v343
        %v411 = vpop.f32.mrb[0].mxu0
        %v412 = vadd.f32 %v339, %v411
        %v413 = vpop.f32.mrb[0].mxu0
        %v414 = vadd.f32 %v339, %v413
        %415 = vdwg.mxu0
        %v416 = vmax.f32 %v412, 0.0
        %v417 = vmax.f32 %v414, 0.0
        %418 = vst [vmem:[#allocation2] sm:$0xff] %v416
        %419 = vst [vmem:[#allocation2 + $0x8] sm:$0xff] %v417
        %s420 = scalar_lea.vmem %s292, 64 [#allocation4]
        %v421 = vld [vmem:[%s420] sm:$0xff]
        %v422 = vld [vmem:[%s420 + $0x8] sm:$0xff]
        %v423 = vld [vmem:[%s420 + $0x10] sm:$0xff]
        %v424 = vld [vmem:[%s420 + $0x18] sm:$0xff]
        %v425 = vld [vmem:[%s420 + $0x20] sm:$0xff]
        %v426 = vld [vmem:[%s420 + $0x28] sm:$0xff]
        %v427 = vld [vmem:[%s420 + $0x30] sm:$0xff]
        %v428 = vld [vmem:[%s420 + $0x38] sm:$0xff]
        %429 = vmatprep.subr.mxu0 %v422
        %430 = vmatpush1.msra.mxu0 %v421
        %431 = vmatprep.subr.mxu0 %v424
        %432 = vmatpush1.msra.mxu0 %v423
        %433 = vmatprep.subr.mxu0 %v426
        %434 = vmatpush1.msra.mxu0 %v425
        %435 = vmatprep.subr.mxu0 %v428
        %436 = vmatpush1.msra.mxu0 %v427
        %437 = vmatprep.subr.mxu0 0.0
        %438 = vmatpush1.msra.mxu0 0.0
        %439 = vmatprep.subr.mxu0 0.0
        %440 = vmatpush1.msra.mxu0 0.0
        %441 = vmatprep.subr.mxu0 0.0
        %442 = vmatpush1.msra.mxu0 0.0
        %443 = vmatprep.subr.mxu0 0.0
        %444 = vmatpush1.msra.mxu0 0.0
        %445 = vmatprep.subr.mxu0 0.0
        %446 = vmatpush1.msra.mxu0 0.0
        %447 = vmatprep.subr.mxu0 0.0
        %448 = vmatpush1.msra.mxu0 0.0
        %449 = vmatprep.subr.mxu0 0.0
        %450 = vmatpush1.msra.mxu0 0.0
        %451 = vmatprep.subr.mxu0 0.0
        %452 = vmatpush1.msra.mxu0 0.0
        %453 = vmatprep.subr.mxu0 0.0
        %454 = vmatpush1.msra.mxu0 0.0
        %455 = vmatprep.subr.mxu0 0.0
        %456 = vmatpush1.msra.mxu0 0.0
        %457 = vmatprep.subr.mxu0 0.0
        %458 = vmatpush1.msra.mxu0 0.0
        %459 = vmatprep.subr.mxu0 0.0
        %460 = vmatpush1.msra.mxu0 0.0
        %461 = vmatprep.subr.mxu0 0.0
        %462 = vmatpush1.msra.mxu0 0.0
        %463 = vmatprep.subr.mxu0 0.0
        %464 = vmatpush1.msra.mxu0 0.0
        %465 = vmatprep.subr.mxu0 0.0
        %466 = vmatpush1.msra.mxu0 0.0
        %467 = vmatprep.subr.mxu0 0.0
        %468 = vmatpush1.msra.mxu0 0.0
        %469 = vmatprep.subr.mxu0 0.0
        %470 = vmatpush1.msra.mxu0 0.0
        %471 = vmatprep.subr.mxu0 0.0
        %472 = vmatpush1.msra.mxu0 0.0
        %473 = vmatprep.subr.mxu0 0.0
        %474 = vmatpush1.msra.mxu0 0.0
        %475 = vmatprep.subr.mxu0 0.0
        %476 = vmatpush1.msra.mxu0 0.0
        %477 = vmatprep.subr.mxu0 0.0
        %478 = vmatpush1.msra.mxu0 0.0
        %479 = vmatprep.subr.mxu0 0.0
        %480 = vmatpush1.msra.mxu0 0.0
        %481 = vmatprep.subr.mxu0 0.0
        %482 = vmatpush1.msra.mxu0 0.0
        %483 = vmatprep.subr.mxu0 0.0
        %484 = vmatpush1.msra.mxu0 0.0
        %485 = vmatprep.subr.mxu0 0.0
        %486 = vmatpush1.msra.mxu0 0.0
        %487 = vmatprep.subr.mxu0 0.0
        %488 = vmatpush1.msra.mxu0 0.0
        %489 = vmatprep.subr.mxu0 0.0
        %490 = vmatpush1.msra.mxu0 0.0
        %491 = vmatprep.subr.mxu0 0.0
        %492 = vmatpush1.msra.mxu0 0.0
        %493 = vmatprep.mubr.f32.mxu0 0.0
        %494 = vmatmul.mubr.f32.gmra.mrb[0].mxu0 %v343
        %v495 = vpop.f32.mrb[0].mxu0
        %v496 = vadd.f32 %v339, %v495
        %v497 = vpop.f32.mrb[0].mxu0
        %v498 = vadd.f32 %v339, %v497
        %499 = vdwg.mxu0
        %v500 = vmax.f32 %v496, 0.0
        %v501 = vmax.f32 %v498, 0.0
        %502 = vst [vmem:[#allocation2 + $0x10] sm:$0xff] %v500
        %503 = vst [vmem:[#allocation2 + $0x18] sm:$0xff] %v501
        %v504 = vld [vmem:[#allocation2] sm:$0xff]
        %v505 = vld [vmem:[#allocation2 + $0x8] sm:$0xff]
        %v506 = vld [vmem:[#allocation2 + $0x10] sm:$0xff]
        %v507 = vld [vmem:[#allocation2 + $0x18] sm:$0xff]
        %v508 = vld [vmem:[%s7] sm:$0xff]
        %v509 = vld [vmem:[%s7 + $0x8] sm:$0xff]
        %v510 = vld [vmem:[%s7 + $0x10] sm:$0xff]
        %v511 = vld [vmem:[%s7 + $0x18] sm:$0xff]
        %v512 = vld [vmem:[%s3] sm:$0xff]
        %v513 = vld [vmem:[%s3 + $0x8] sm:$0xff]
        %v514 = vld [vmem:[%s3 + $0x10] sm:$0xff]
        %v515 = vld [vmem:[%s3 + $0x18] sm:$0xff]
        %v516 = vld [vmem:[%s3 + $0x20] sm:$0xff]
        %v517 = vld [vmem:[%s3 + $0x28] sm:$0xff]
        %v518 = vld [vmem:[%s3 + $0x30] sm:$0xff]
        %v519 = vld [vmem:[%s3 + $0x38] sm:$0xff]
        %v520 = vld [vmem:[%s3 + $0x40] sm:$0xff]
        %v521 = vld [vmem:[%s3 + $0x48] sm:$0xff]
        %v522 = vld [vmem:[%s3 + $0x50] sm:$0xff]
        %v523 = vld [vmem:[%s3 + $0x58] sm:$0xff]
        %v524 = vld [vmem:[%s3 + $0x60] sm:$0xff]
        %v525 = vld [vmem:[%s3 + $0x68] sm:$0xff]
        %v526 = vld [vmem:[%s3 + $0x70] sm:$0xff]
        %v527 = vld [vmem:[%s3 + $0x78] sm:$0xff]
        %v528 = vld [vmem:[%s4] sm:$0xff]
        %529 = vrot.lane.b32.xlu0 %v504, 1
        %v530 = vpop.permute.xlu0 %529
        %531 = vrot.lane.b32.xlu0 %v505, 1
        %v532 = vpop.permute.xlu0 %531
        %533 = vrot.lane.b32.xlu0 %v506, 1
        %v534 = vpop.permute.xlu0 %533
        %535 = vrot.lane.b32.xlu0 %v507, 1
        %v536 = vpop.permute.xlu0 %535
        %v537 = vlaneseq
        %v538 = vand.u32 %v537, 127
        %vm539 = vcmp.lt.s32.totalorder %v538, 1
        %v540 = vsel %vm539, %v534, %v536
        %v541 = vsel %vm539, %v532, %v534
        %v542 = vsel %vm539, %v530, %v532
        %v543 = vsel %vm539, %v536, %v530
        %v544 = vlaneseq
        %v545 = vshrl.u32 %v544, 7
        %v546 = vsub.s32 2, %v545
        %v547 = vrot.slane %v508, %v546
        %v548 = vlaneseq
        %v549 = vshrl.u32 %v548, 7
        %v550 = vsub.s32 2, %v549
        %v551 = vrot.slane %v509, %v550
        %v552 = vlaneseq
        %v553 = vshrl.u32 %v552, 7
        %v554 = vsub.s32 2, %v553
        %v555 = vrot.slane %v510, %v554
        %v556 = vlaneseq
        %v557 = vshrl.u32 %v556, 7
        %v558 = vsub.s32 2, %v557
        %v559 = vrot.slane %v511, %v558
        %v560 = vmul.f32 %v543, %v547
        %v561 = vmul.f32 %v542, %v551
        %v562 = vmul.f32 %v541, %v555
        %v563 = vmul.f32 %v540, %v559
        %564 = vrot.lane.b32.xlu0 %v504, 127
        %v565 = vpop.permute.xlu0 %564
        %566 = vrot.lane.b32.xlu0 %v505, 127
        %v567 = vpop.permute.xlu0 %566
        %568 = vrot.lane.b32.xlu0 %v506, 127
        %v569 = vpop.permute.xlu0 %568
        %570 = vrot.lane.b32.xlu0 %v507, 127
        %v571 = vpop.permute.xlu0 %570
        %vm572 = vcmp.lt.s32.totalorder %v538, 127
        %v573 = vsel %vm572, %v569, %v571
        %v574 = vsel %vm572, %v567, %v569
        %v575 = vsel %vm572, %v565, %v567
        %v576 = vsel %vm572, %v571, %v565
        %v577 = vlaneseq
        %v578 = vshrl.u32 %v577, 7
        %v579 = vsub.s32 3, %v578
        %v580 = vrot.slane %v508, %v579
        %v581 = vlaneseq
        %v582 = vshrl.u32 %v581, 7
        %v583 = vsub.s32 3, %v582
        %v584 = vrot.slane %v509, %v583
        %v585 = vlaneseq
        %v586 = vshrl.u32 %v585, 7
        %v587 = vsub.s32 3, %v586
        %v588 = vrot.slane %v510, %v587
        %v589 = vlaneseq
        %v590 = vshrl.u32 %v589, 7
        %v591 = vsub.s32 3, %v590
        %v592 = vrot.slane %v511, %v591
        %v593 = vmul.f32 %v575, %v580
        %v594 = vmul.f32 %v574, %v584
        %v595 = vmul.f32 %v573, %v588
        %v596 = vmul.f32 %v576, %v592
        %597 = vrot.lane.b32.xlu0 %v504, 16
        %v598 = vpop.permute.xlu0 %597
        %599 = vrot.lane.b32.xlu0 %v505, 16
        %v600 = vpop.permute.xlu0 %599
        %601 = vrot.lane.b32.xlu0 %v506, 16
        %v602 = vpop.permute.xlu0 %601
        %603 = vrot.lane.b32.xlu0 %v507, 16
        %v604 = vpop.permute.xlu0 %603
        %vm605 = vcmp.lt.s32.totalorder %v538, 16
        %v606 = vsel %vm605, %v602, %v604
        %v607 = vsel %vm605, %v600, %v602
        %v608 = vsel %vm605, %v598, %v600
        %v609 = vsel %vm605, %v604, %v598
        %v610 = vlaneseq
        %v611 = vshrl.u32 %v610, 7
        %v612 = vsub.s32 0, %v611
        %v613 = vrot.slane %v508, %v612
        %v614 = vlaneseq
        %v615 = vshrl.u32 %v614, 7
        %v616 = vsub.s32 0, %v615
        %v617 = vrot.slane %v509, %v616
        %v618 = vlaneseq
        %v619 = vshrl.u32 %v618, 7
        %v620 = vsub.s32 0, %v619
        %v621 = vrot.slane %v510, %v620
        %v622 = vlaneseq
        %v623 = vshrl.u32 %v622, 7
        %v624 = vsub.s32 0, %v623
        %v625 = vrot.slane %v511, %v624
        %v626 = vmul.f32 %v609, %v613
        %v627 = vmul.f32 %v608, %v617
        %v628 = vmul.f32 %v607, %v621
        %v629 = vmul.f32 %v606, %v625
        %630 = vrot.lane.b32.xlu0 %v504, 17
        %v631 = vpop.permute.xlu0 %630
        %632 = vrot.lane.b32.xlu0 %v505, 17
        %v633 = vpop.permute.xlu0 %632
        %634 = vrot.lane.b32.xlu0 %v506, 17
        %v635 = vpop.permute.xlu0 %634
        %636 = vrot.lane.b32.xlu0 %v507, 17
        %v637 = vpop.permute.xlu0 %636
        %vm638 = vcmp.lt.s32.totalorder %v538, 17
        %v639 = vsel %vm638, %v635, %v637
        %v640 = vsel %vm638, %v633, %v635
        %v641 = vsel %vm638, %v631, %v633
        %v642 = vsel %vm638, %v637, %v631
        %v643 = vlaneseq
        %v644 = vshrl.u32 %v643, 7
        %v645 = vsub.s32 4, %v644
        %v646 = vrot.slane %v508, %v645
        %v647 = vlaneseq
        %v648 = vshrl.u32 %v647, 7
        %v649 = vsub.s32 4, %v648
        %v650 = vrot.slane %v509, %v649
        %v651 = vlaneseq
        %v652 = vshrl.u32 %v651, 7
        %v653 = vsub.s32 4, %v652
        %v654 = vrot.slane %v510, %v653
        %v655 = vlaneseq
        %v656 = vshrl.u32 %v655, 7
        %v657 = vsub.s32 4, %v656
        %v658 = vrot.slane %v511, %v657
        %v659 = vmul.f32 %v642, %v646
        %v660 = vmul.f32 %v641, %v650
        %v661 = vmul.f32 %v640, %v654
        %v662 = vmul.f32 %v639, %v658
        %663 = vrot.lane.b32.xlu0 %v504, 15
        %v664 = vpop.permute.xlu0 %663
        %665 = vrot.lane.b32.xlu0 %v505, 15
        %v666 = vpop.permute.xlu0 %665
        %667 = vrot.lane.b32.xlu0 %v506, 15
        %v668 = vpop.permute.xlu0 %667
        %669 = vrot.lane.b32.xlu0 %v507, 15
        %v670 = vpop.permute.xlu0 %669
        %vm671 = vcmp.lt.s32.totalorder %v538, 15
        %v672 = vsel %vm671, %v668, %v670
        %v673 = vsel %vm671, %v666, %v668
        %v674 = vsel %vm671, %v664, %v666
        %v675 = vsel %vm671, %v670, %v664
        %v676 = vlaneseq
        %v677 = vshrl.u32 %v676, 7
        %v678 = vsub.s32 5, %v677
        %v679 = vrot.slane %v508, %v678
        %v680 = vlaneseq
        %v681 = vshrl.u32 %v680, 7
        %v682 = vsub.s32 5, %v681
        %v683 = vrot.slane %v509, %v682
        %v684 = vlaneseq
        %v685 = vshrl.u32 %v684, 7
        %v686 = vsub.s32 5, %v685
        %v687 = vrot.slane %v510, %v686
        %v688 = vlaneseq
        %v689 = vshrl.u32 %v688, 7
        %v690 = vsub.s32 5, %v689
        %v691 = vrot.slane %v511, %v690
        %v692 = vmul.f32 %v675, %v679
        %v693 = vmul.f32 %v674, %v683
        %v694 = vmul.f32 %v673, %v687
        %v695 = vmul.f32 %v672, %v691
        %697 = vset.pattern.permute.xlu0 0
        %698 = vperm.xlu0 %697, %v517
        %v699 = vpop.permute.xlu0 %698
        %v701 = vmul.f32 %v504, %v699
        %v702 = vmul.f32 %v505, %v699
        %v703 = vmul.f32 %v506, %v699
        %v704 = vmul.f32 %v507, %v699
        %706 = vset.pattern.permute.xlu0 0
        %707 = vperm.xlu0 %706, %v519
        %v708 = vpop.permute.xlu0 %707
        %v710 = vmul.f32 %v560, %v708
        %v711 = vmul.f32 %v561, %v708
        %v712 = vmul.f32 %v562, %v708
        %v713 = vmul.f32 %v563, %v708
        %v714 = vadd.f32 %v701, %v710
        %v715 = vadd.f32 %v702, %v711
        %v716 = vadd.f32 %v703, %v712
        %v717 = vadd.f32 %v704, %v713
        %719 = vset.pattern.permute.xlu0 0
        %720 = vperm.xlu0 %719, %v525
        %v721 = vpop.permute.xlu0 %720
        %v723 = vmul.f32 %v626, %v721
        %v724 = vmul.f32 %v627, %v721
        %v725 = vmul.f32 %v628, %v721
        %v726 = vmul.f32 %v629, %v721
        %v727 = vadd.f32 %v714, %v723
        %v728 = vadd.f32 %v715, %v724
        %v729 = vadd.f32 %v716, %v725
        %v730 = vadd.f32 %v717, %v726
        %732 = vset.pattern.permute.xlu0 0
        %733 = vperm.xlu0 %732, %v527
        %v734 = vpop.permute.xlu0 %733
        %v736 = vmul.f32 %v659, %v734
        %v737 = vmul.f32 %v660, %v734
        %v738 = vmul.f32 %v661, %v734
        %v739 = vmul.f32 %v662, %v734
        %v740 = vadd.f32 %v727, %v736
        %v741 = vadd.f32 %v728, %v737
        %v742 = vadd.f32 %v729, %v738
        %v743 = vadd.f32 %v730, %v739
        %745 = vset.pattern.permute.xlu0 0
        %746 = vperm.xlu0 %745, %v528
        %v747 = vpop.permute.xlu0 %746
        %v749 = vadd.f32 %v740, %v747
        %v750 = vadd.f32 %v741, %v747
        %v751 = vadd.f32 %v742, %v747
        %v752 = vadd.f32 %v743, %v747
        %v753 = vmax.f32 %v749, 0.0
        %v754 = vmax.f32 %v750, 0.0
        %v755 = vmax.f32 %v751, 0.0
        %v756 = vmax.f32 %v752, 0.0
        %757 = vst [vmem:[#allocation3] sm:$0xff] %v753
        %758 = vst [vmem:[#allocation3 + $0x8] sm:$0xff] %v754
        %759 = vst [vmem:[#allocation3 + $0x10] sm:$0xff] %v755
        %760 = vst [vmem:[#allocation3 + $0x18] sm:$0xff] %v756
        %762 = vset.pattern.permute.xlu0 0
        %763 = vperm.xlu0 %762, %v518
        %v764 = vpop.permute.xlu0 %763
        %v766 = vmul.f32 %v504, %v764
        %v767 = vmul.f32 %v505, %v764
        %v768 = vmul.f32 %v506, %v764
        %v769 = vmul.f32 %v507, %v764
        %771 = vset.pattern.permute.xlu0 0
        %772 = vperm.xlu0 %771, %v516
        %v773 = vpop.permute.xlu0 %772
        %v775 = vmul.f32 %v593, %v773
        %v776 = vmul.f32 %v594, %v773
        %v777 = vmul.f32 %v595, %v773
        %v778 = vmul.f32 %v596, %v773
        %v779 = vadd.f32 %v766, %v775
        %v780 = vadd.f32 %v767, %v776
        %v781 = vadd.f32 %v768, %v777
        %v782 = vadd.f32 %v769, %v778
        %784 = vset.pattern.permute.xlu0 0
        %785 = vperm.xlu0 %784, %v526
        %v786 = vpop.permute.xlu0 %785
        %v788 = vmul.f32 %v626, %v786
        %v789 = vmul.f32 %v627, %v786
        %v790 = vmul.f32 %v628, %v786
        %v791 = vmul.f32 %v629, %v786
        %v792 = vadd.f32 %v779, %v788
        %v793 = vadd.f32 %v780, %v789
        %v794 = vadd.f32 %v781, %v790
        %v795 = vadd.f32 %v782, %v791
        %797 = vset.pattern.permute.xlu0 0
        %798 = vperm.xlu0 %797, %v524
        %v799 = vpop.permute.xlu0 %798
        %v801 = vmul.f32 %v692, %v799
        %v802 = vmul.f32 %v693, %v799
        %v803 = vmul.f32 %v694, %v799
        %v804 = vmul.f32 %v695, %v799
        %v805 = vadd.f32 %v792, %v801
        %v806 = vadd.f32 %v793, %v802
        %v807 = vadd.f32 %v794, %v803
        %v808 = vadd.f32 %v795, %v804
        %v809 = vadd.f32 %v805, %v747
        %v810 = vadd.f32 %v806, %v747
        %v811 = vadd.f32 %v807, %v747
        %v812 = vadd.f32 %v808, %v747
        %v813 = vmax.f32 %v809, 0.0
        %v814 = vmax.f32 %v810, 0.0
        %v815 = vmax.f32 %v811, 0.0
        %v816 = vmax.f32 %v812, 0.0
        %817 = vst [vmem:[#allocation3 + $0x20] sm:$0xff] %v813
        %818 = vst [vmem:[#allocation3 + $0x28] sm:$0xff] %v814
        %819 = vst [vmem:[#allocation3 + $0x30] sm:$0xff] %v815
        %820 = vst [vmem:[#allocation3 + $0x38] sm:$0xff] %v816
        %821 = vrot.lane.b32.xlu0 %v504, 112
        %v822 = vpop.permute.xlu0 %821
        %823 = vrot.lane.b32.xlu0 %v505, 112
        %v824 = vpop.permute.xlu0 %823
        %825 = vrot.lane.b32.xlu0 %v506, 112
        %v826 = vpop.permute.xlu0 %825
        %827 = vrot.lane.b32.xlu0 %v507, 112
        %v828 = vpop.permute.xlu0 %827
        %vm829 = vcmp.lt.s32.totalorder %v538, 112
        %v830 = vsel %vm829, %v826, %v828
        %v831 = vsel %vm829, %v824, %v826
        %v832 = vsel %vm829, %v822, %v824
        %v833 = vsel %vm829, %v828, %v822
        %v834 = vlaneseq
        %v835 = vshrl.u32 %v834, 7
        %v836 = vsub.s32 1, %v835
        %v837 = vrot.slane %v508, %v836
        %v838 = vlaneseq
        %v839 = vshrl.u32 %v838, 7
        %v840 = vsub.s32 1, %v839
        %v841 = vrot.slane %v509, %v840
        %v842 = vlaneseq
        %v843 = vshrl.u32 %v842, 7
        %v844 = vsub.s32 1, %v843
        %v845 = vrot.slane %v510, %v844
        %v846 = vlaneseq
        %v847 = vshrl.u32 %v846, 7
        %v848 = vsub.s32 1, %v847
        %v849 = vrot.slane %v511, %v848
        %v850 = vmul.f32 %v832, %v837
        %v851 = vmul.f32 %v831, %v841
        %v852 = vmul.f32 %v830, %v845
        %v853 = vmul.f32 %v833, %v849
        %854 = vrot.lane.b32.xlu0 %v504, 113
        %v855 = vpop.permute.xlu0 %854
        %856 = vrot.lane.b32.xlu0 %v505, 113
        %v857 = vpop.permute.xlu0 %856
        %858 = vrot.lane.b32.xlu0 %v506, 113
        %v859 = vpop.permute.xlu0 %858
        %860 = vrot.lane.b32.xlu0 %v507, 113
        %v861 = vpop.permute.xlu0 %860
        %vm862 = vcmp.lt.s32.totalorder %v538, 113
        %v863 = vsel %vm862, %v859, %v861
        %v864 = vsel %vm862, %v857, %v859
        %v865 = vsel %vm862, %v855, %v857
        %v866 = vsel %vm862, %v861, %v855
        %v867 = vlaneseq
        %v868 = vshrl.u32 %v867, 7
        %v869 = vsub.s32 6, %v868
        %v870 = vrot.slane %v508, %v869
        %v871 = vlaneseq
        %v872 = vshrl.u32 %v871, 7
        %v873 = vsub.s32 6, %v872
        %v874 = vrot.slane %v509, %v873
        %v875 = vlaneseq
        %v876 = vshrl.u32 %v875, 7
        %v877 = vsub.s32 6, %v876
        %v878 = vrot.slane %v510, %v877
        %v879 = vlaneseq
        %v880 = vshrl.u32 %v879, 7
        %v881 = vsub.s32 6, %v880
        %v882 = vrot.slane %v511, %v881
        %v883 = vmul.f32 %v865, %v870
        %v884 = vmul.f32 %v864, %v874
        %v885 = vmul.f32 %v863, %v878
        %v886 = vmul.f32 %v866, %v882
        %887 = vrot.lane.b32.xlu0 %v504, 111
        %v888 = vpop.permute.xlu0 %887
        %889 = vrot.lane.b32.xlu0 %v505, 111
        %v890 = vpop.permute.xlu0 %889
        %891 = vrot.lane.b32.xlu0 %v506, 111
        %v892 = vpop.permute.xlu0 %891
        %893 = vrot.lane.b32.xlu0 %v507, 111
        %v894 = vpop.permute.xlu0 %893
        %vm895 = vcmp.lt.s32.totalorder %v538, 111
        %v896 = vsel %vm895, %v892, %v894
        %v897 = vsel %vm895, %v890, %v892
        %v898 = vsel %vm895, %v888, %v890
        %v899 = vsel %vm895, %v894, %v888
        %v900 = vlaneseq
        %v901 = vshrl.u32 %v900, 7
        %v902 = vsub.s32 7, %v901
        %v903 = vrot.slane %v508, %v902
        %v904 = vlaneseq
        %v905 = vshrl.u32 %v904, 7
        %v906 = vsub.s32 7, %v905
        %v907 = vrot.slane %v509, %v906
        %v908 = vlaneseq
        %v909 = vshrl.u32 %v908, 7
        %v910 = vsub.s32 7, %v909
        %v911 = vrot.slane %v510, %v910
        %v912 = vlaneseq
        %v913 = vshrl.u32 %v912, 7
        %v914 = vsub.s32 7, %v913
        %v915 = vrot.slane %v511, %v914
        %v916 = vmul.f32 %v898, %v903
        %v917 = vmul.f32 %v897, %v907
        %v918 = vmul.f32 %v896, %v911
        %v919 = vmul.f32 %v899, %v915
        %921 = vset.pattern.permute.xlu0 0
        %922 = vperm.xlu0 %921, %v521
        %v923 = vpop.permute.xlu0 %922
        %v925 = vmul.f32 %v504, %v923
        %v926 = vmul.f32 %v505, %v923
        %v927 = vmul.f32 %v506, %v923
        %v928 = vmul.f32 %v507, %v923
        %930 = vset.pattern.permute.xlu0 0
        %931 = vperm.xlu0 %930, %v523
        %v932 = vpop.permute.xlu0 %931
        %v934 = vmul.f32 %v560, %v932
        %v935 = vmul.f32 %v561, %v932
        %v936 = vmul.f32 %v562, %v932
        %v937 = vmul.f32 %v563, %v932
        %v938 = vadd.f32 %v925, %v934
        %v939 = vadd.f32 %v926, %v935
        %v940 = vadd.f32 %v927, %v936
        %v941 = vadd.f32 %v928, %v937
        %943 = vset.pattern.permute.xlu0 0
        %944 = vperm.xlu0 %943, %v513
        %v945 = vpop.permute.xlu0 %944
        %v947 = vmul.f32 %v850, %v945
        %v948 = vmul.f32 %v851, %v945
        %v949 = vmul.f32 %v852, %v945
        %v950 = vmul.f32 %v853, %v945
        %v951 = vadd.f32 %v938, %v947
        %v952 = vadd.f32 %v939, %v948
        %v953 = vadd.f32 %v940, %v949
        %v954 = vadd.f32 %v941, %v950
        %956 = vset.pattern.permute.xlu0 0
        %957 = vperm.xlu0 %956, %v515
        %v958 = vpop.permute.xlu0 %957
        %v960 = vmul.f32 %v883, %v958
        %v961 = vmul.f32 %v884, %v958
        %v962 = vmul.f32 %v885, %v958
        %v963 = vmul.f32 %v886, %v958
        %v964 = vadd.f32 %v951, %v960
        %v965 = vadd.f32 %v952, %v961
        %v966 = vadd.f32 %v953, %v962
        %v967 = vadd.f32 %v954, %v963
        %v968 = vadd.f32 %v964, %v747
        %v969 = vadd.f32 %v965, %v747
        %v970 = vadd.f32 %v966, %v747
        %v971 = vadd.f32 %v967, %v747
        %v972 = vmax.f32 %v968, 0.0
        %v973 = vmax.f32 %v969, 0.0
        %v974 = vmax.f32 %v970, 0.0
        %v975 = vmax.f32 %v971, 0.0
        %976 = vst [vmem:[#allocation3 + $0x40] sm:$0xff] %v972
        %977 = vst [vmem:[#allocation3 + $0x48] sm:$0xff] %v973
        %978 = vst [vmem:[#allocation3 + $0x50] sm:$0xff] %v974
        %979 = vst [vmem:[#allocation3 + $0x58] sm:$0xff] %v975
        %981 = vset.pattern.permute.xlu0 0
        %982 = vperm.xlu0 %981, %v522
        %v983 = vpop.permute.xlu0 %982
        %v985 = vmul.f32 %v504, %v983
        %v986 = vmul.f32 %v505, %v983
        %v987 = vmul.f32 %v506, %v983
        %v988 = vmul.f32 %v507, %v983
        %990 = vset.pattern.permute.xlu0 0
        %991 = vperm.xlu0 %990, %v520
        %v992 = vpop.permute.xlu0 %991
        %v994 = vmul.f32 %v593, %v992
        %v995 = vmul.f32 %v594, %v992
        %v996 = vmul.f32 %v595, %v992
        %v997 = vmul.f32 %v596, %v992
        %v998 = vadd.f32 %v985, %v994
        %v999 = vadd.f32 %v986, %v995
        %v1000 = vadd.f32 %v987, %v996
        %v1001 = vadd.f32 %v988, %v997
        %1003 = vset.pattern.permute.xlu0 0
        %1004 = vperm.xlu0 %1003, %v514
        %v1005 = vpop.permute.xlu0 %1004
        %v1007 = vmul.f32 %v850, %v1005
        %v1008 = vmul.f32 %v851, %v1005
        %v1009 = vmul.f32 %v852, %v1005
        %v1010 = vmul.f32 %v853, %v1005
        %v1011 = vadd.f32 %v998, %v1007
        %v1012 = vadd.f32 %v999, %v1008
        %v1013 = vadd.f32 %v1000, %v1009
        %v1014 = vadd.f32 %v1001, %v1010
        %1016 = vset.pattern.permute.xlu0 0
        %1017 = vperm.xlu0 %1016, %v512
        %v1018 = vpop.permute.xlu0 %1017
        %v1020 = vmul.f32 %v916, %v1018
        %v1021 = vmul.f32 %v917, %v1018
        %v1022 = vmul.f32 %v918, %v1018
        %v1023 = vmul.f32 %v919, %v1018
        %v1024 = vadd.f32 %v1011, %v1020
        %v1025 = vadd.f32 %v1012, %v1021
        %v1026 = vadd.f32 %v1013, %v1022
        %v1027 = vadd.f32 %v1014, %v1023
        %v1028 = vadd.f32 %v1024, %v747
        %v1029 = vadd.f32 %v1025, %v747
        %v1030 = vadd.f32 %v1026, %v747
        %v1031 = vadd.f32 %v1027, %v747
        %v1032 = vmax.f32 %v1028, 0.0
        %v1033 = vmax.f32 %v1029, 0.0
        %v1034 = vmax.f32 %v1030, 0.0
        %v1035 = vmax.f32 %v1031, 0.0
        %1036 = vst [vmem:[#allocation3 + $0x60] sm:$0xff] %v1032
        %1037 = vst [vmem:[#allocation3 + $0x68] sm:$0xff] %v1033
        %1038 = vst [vmem:[#allocation3 + $0x70] sm:$0xff] %v1034
        %1039 = vst [vmem:[#allocation3 + $0x78] sm:$0xff] %v1035
        %v1040 = vld [vmem:[%s5] sm:$0xff]
        %v1041 = vld [vmem:[%s5 + $0x8] sm:$0xff]
        %v1042 = vld [vmem:[#allocation3] sm:$0xff]
        %v1043 = vld [vmem:[#allocation3 + $0x8] sm:$0xff]
        %v1044 = vld [vmem:[#allocation3 + $0x10] sm:$0xff]
        %v1045 = vld [vmem:[#allocation3 + $0x18] sm:$0xff]
        %v1046 = vld [vmem:[#allocation3 + $0x20] sm:$0xff]
        %v1047 = vld [vmem:[#allocation3 + $0x28] sm:$0xff]
        %v1048 = vld [vmem:[#allocation3 + $0x30] sm:$0xff]
        %v1049 = vld [vmem:[#allocation3 + $0x38] sm:$0xff]
        %v1050 = vld [vmem:[#allocation3 + $0x40] sm:$0xff]
        %v1051 = vld [vmem:[#allocation3 + $0x48] sm:$0xff]
        %v1052 = vld [vmem:[#allocation3 + $0x50] sm:$0xff]
        %v1053 = vld [vmem:[#allocation3 + $0x58] sm:$0xff]
        %v1054 = vld [vmem:[#allocation3 + $0x60] sm:$0xff]
        %v1055 = vld [vmem:[#allocation3 + $0x68] sm:$0xff]
        %v1056 = vld [vmem:[#allocation3 + $0x70] sm:$0xff]
        %v1057 = vld [vmem:[#allocation3 + $0x78] sm:$0xff]
        %v1058 = vld [vmem:[%s6] sm:$0xff]
        %v1059 = vld [vmem:[%s6 + $0x8] sm:$0xff]
        %1061 = vset.pattern.permute.xlu0 0
        %1062 = vperm.xlu0 %1061, %v1058
        %v1063 = vpop.permute.xlu0 %1062
        %1066 = vset.pattern.permute.xlu0 0
        %1067 = vperm.xlu0 %1066, %v1059
        %v1068 = vpop.permute.xlu0 %1067
        %vm1070 = vcmask 64512
        %v1072 = vsel %vm1070, %v1040, 0
        %v1075 = vsel %vm1070, %v1041, 0
        %1077 = vmatprep.subr.mxu0 %v1043
        %1078 = vmatpush1.msra.mxu0 %v1042
        %1079 = vmatprep.subr.mxu0 0.0
        %1080 = vmatpush1.msra.mxu0 0.0
        %1081 = vmatprep.subr.mxu0 0.0
        %1082 = vmatpush1.msra.mxu0 0.0
        %1083 = vmatprep.subr.mxu0 0.0
        %1084 = vmatpush1.msra.mxu0 0.0
        %1085 = vmatprep.subr.mxu0 0.0
        %1086 = vmatpush1.msra.mxu0 0.0
        %1087 = vmatprep.subr.mxu0 0.0
        %1088 = vmatpush1.msra.mxu0 0.0
        %1089 = vmatprep.subr.mxu0 0.0
        %1090 = vmatpush1.msra.mxu0 0.0
        %1091 = vmatprep.subr.mxu0 0.0
        %1092 = vmatpush1.msra.mxu0 0.0
        %1093 = vmatprep.subr.mxu0 0.0
        %1094 = vmatpush1.msra.mxu0 0.0
        %1095 = vmatprep.subr.mxu0 0.0
        %1096 = vmatpush1.msra.mxu0 0.0
        %1097 = vmatprep.subr.mxu0 0.0
        %1098 = vmatpush1.msra.mxu0 0.0
        %1099 = vmatprep.subr.mxu0 0.0
        %1100 = vmatpush1.msra.mxu0 0.0
        %1101 = vmatprep.subr.mxu0 0.0
        %1102 = vmatpush1.msra.mxu0 0.0
        %1103 = vmatprep.subr.mxu0 0.0
        %1104 = vmatpush1.msra.mxu0 0.0
        %1105 = vmatprep.subr.mxu0 0.0
        %1106 = vmatpush1.msra.mxu0 0.0
        %1107 = vmatprep.subr.mxu0 0.0
        %1108 = vmatpush1.msra.mxu0 0.0
        %1109 = vmatprep.subr.mxu0 0.0
        %1110 = vmatpush1.msra.mxu0 0.0
        %1111 = vmatprep.subr.mxu0 0.0
        %1112 = vmatpush1.msra.mxu0 0.0
        %1113 = vmatprep.subr.mxu0 0.0
        %1114 = vmatpush1.msra.mxu0 0.0
        %1115 = vmatprep.subr.mxu0 0.0
        %1116 = vmatpush1.msra.mxu0 0.0
        %1117 = vmatprep.subr.mxu0 0.0
        %1118 = vmatpush1.msra.mxu0 0.0
        %1119 = vmatprep.subr.mxu0 0.0
        %1120 = vmatpush1.msra.mxu0 0.0
        %1121 = vmatprep.subr.mxu0 0.0
        %1122 = vmatpush1.msra.mxu0 0.0
        %1123 = vmatprep.subr.mxu0 0.0
        %1124 = vmatpush1.msra.mxu0 0.0
        %1125 = vmatprep.subr.mxu0 0.0
        %1126 = vmatpush1.msra.mxu0 0.0
        %1127 = vmatprep.subr.mxu0 0.0
        %1128 = vmatpush1.msra.mxu0 0.0
        %1129 = vmatprep.subr.mxu0 0.0
        %1130 = vmatpush1.msra.mxu0 0.0
        %1131 = vmatprep.subr.mxu0 0.0
        %1132 = vmatpush1.msra.mxu0 0.0
        %1133 = vmatprep.subr.mxu0 0.0
        %1134 = vmatpush1.msra.mxu0 0.0
        %1135 = vmatprep.subr.mxu0 0.0
        %1136 = vmatpush1.msra.mxu0 0.0
        %1137 = vmatprep.subr.mxu0 0.0
        %1138 = vmatpush1.msra.mxu0 0.0
        %1139 = vmatprep.subr.mxu0 0.0
        %1140 = vmatpush1.msra.mxu0 0.0
        %1141 = vmatprep.mubr.f32.mxu0 0.0
        %1142 = vmatmul.mubr.f32.gmra.mrb[0].mxu0 %v1072
        %v1143 = vpop.f32.mrb[0].mxu0
        %v1144 = vadd.f32 %v1063, %v1143
        %v1145 = vpop.f32.mrb[0].mxu0
        %v1146 = vadd.f32 %v1063, %v1145
        %1147 = vmatprep.mubr.f32.mxu0 0.0
        %1148 = vmatmul.mubr.f32.gmra.mrb[0].mxu0 %v1075
        %v1149 = vpop.f32.mrb[0].mxu0
        %v1150 = vadd.f32 %v1068, %v1149
        %v1151 = vpop.f32.mrb[0].mxu0
        %v1152 = vadd.f32 %v1068, %v1151
        %1153 = vdwg.mxu0
        %1154 = vmatprep.subr.mxu0 %v1045
        %1155 = vmatpush1.msra.mxu0 %v1044
        %1156 = vmatprep.subr.mxu0 0.0
        %1157 = vmatpush1.msra.mxu0 0.0
        %1158 = vmatprep.subr.mxu0 0.0
        %1159 = vmatpush1.msra.mxu0 0.0
        %1160 = vmatprep.subr.mxu0 0.0
        %1161 = vmatpush1.msra.mxu0 0.0
        %1162 = vmatprep.subr.mxu0 0.0
        %1163 = vmatpush1.msra.mxu0 0.0
        %1164 = vmatprep.subr.mxu0 0.0
        %1165 = vmatpush1.msra.mxu0 0.0
        %1166 = vmatprep.subr.mxu0 0.0
        %1167 = vmatpush1.msra.mxu0 0.0
        %1168 = vmatprep.subr.mxu0 0.0
        %1169 = vmatpush1.msra.mxu0 0.0
        %1170 = vmatprep.subr.mxu0 0.0
        %1171 = vmatpush1.msra.mxu0 0.0
        %1172 = vmatprep.subr.mxu0 0.0
        %1173 = vmatpush1.msra.mxu0 0.0
        %1174 = vmatprep.subr.mxu0 0.0
        %1175 = vmatpush1.msra.mxu0 0.0
        %1176 = vmatprep.subr.mxu0 0.0
        %1177 = vmatpush1.msra.mxu0 0.0
        %1178 = vmatprep.subr.mxu0 0.0
        %1179 = vmatpush1.msra.mxu0 0.0
        %1180 = vmatprep.subr.mxu0 0.0
        %1181 = vmatpush1.msra.mxu0 0.0
        %1182 = vmatprep.subr.mxu0 0.0
        %1183 = vmatpush1.msra.mxu0 0.0
        %1184 = vmatprep.subr.mxu0 0.0
        %1185 = vmatpush1.msra.mxu0 0.0
        %1186 = vmatprep.subr.mxu0 0.0
        %1187 = vmatpush1.msra.mxu0 0.0
        %1188 = vmatprep.subr.mxu0 0.0
        %1189 = vmatpush1.msra.mxu0 0.0
        %1190 = vmatprep.subr.mxu0 0.0
        %1191 = vmatpush1.msra.mxu0 0.0
        %1192 = vmatprep.subr.mxu0 0.0
        %1193 = vmatpush1.msra.mxu0 0.0
        %1194 = vmatprep.subr.mxu0 0.0
        %1195 = vmatpush1.msra.mxu0 0.0
        %1196 = vmatprep.subr.mxu0 0.0
        %1197 = vmatpush1.msra.mxu0 0.0
        %1198 = vmatprep.subr.mxu0 0.0
        %1199 = vmatpush1.msra.mxu0 0.0
        %1200 = vmatprep.subr.mxu0 0.0
        %1201 = vmatpush1.msra.mxu0 0.0
        %1202 = vmatprep.subr.mxu0 0.0
        %1203 = vmatpush1.msra.mxu0 0.0
        %1204 = vmatprep.subr.mxu0 0.0
        %1205 = vmatpush1.msra.mxu0 0.0
        %1206 = vmatprep.subr.mxu0 0.0
        %1207 = vmatpush1.msra.mxu0 0.0
        %1208 = vmatprep.subr.mxu0 0.0
        %1209 = vmatpush1.msra.mxu0 0.0
        %1210 = vmatprep.subr.mxu0 0.0
        %1211 = vmatpush1.msra.mxu0 0.0
        %1212 = vmatprep.subr.mxu0 0.0
        %1213 = vmatpush1.msra.mxu0 0.0
        %1214 = vmatprep.subr.mxu0 0.0
        %1215 = vmatpush1.msra.mxu0 0.0
        %1216 = vmatprep.subr.mxu0 0.0
        %1217 = vmatpush1.msra.mxu0 0.0
        %1218 = vmatprep.mubr.f32.mxu0 0.0
        %1219 = vmatmul.mubr.f32.gmra.mrb[0].mxu0 %v1072
        %v1220 = vpop.f32.mrb[0].mxu0
        %v1221 = vadd.f32 %v1063, %v1220
        %v1222 = vpop.f32.mrb[0].mxu0
        %v1223 = vadd.f32 %v1063, %v1222
        %1224 = vmatprep.mubr.f32.mxu0 0.0
        %1225 = vmatmul.mubr.f32.gmra.mrb[0].mxu0 %v1075
        %v1226 = vpop.f32.mrb[0].mxu0
        %v1227 = vadd.f32 %v1068, %v1226
        %v1228 = vpop.f32.mrb[0].mxu0
        %v1229 = vadd.f32 %v1068, %v1228
        %1230 = vdwg.mxu0
        %1231 = vmatprep.subr.mxu0 %v1047
        %1232 = vmatpush1.msra.mxu0 %v1046
        %1233 = vmatprep.subr.mxu0 0.0
        %1234 = vmatpush1.msra.mxu0 0.0
        %1235 = vmatprep.subr.mxu0 0.0
        %1236 = vmatpush1.msra.mxu0 0.0
        %1237 = vmatprep.subr.mxu0 0.0
        %1238 = vmatpush1.msra.mxu0 0.0
        %1239 = vmatprep.subr.mxu0 0.0
        %1240 = vmatpush1.msra.mxu0 0.0
        %1241 = vmatprep.subr.mxu0 0.0
        %1242 = vmatpush1.msra.mxu0 0.0
        %1243 = vmatprep.subr.mxu0 0.0
        %1244 = vmatpush1.msra.mxu0 0.0
        %1245 = vmatprep.subr.mxu0 0.0
        %1246 = vmatpush1.msra.mxu0 0.0
        %1247 = vmatprep.subr.mxu0 0.0
        %1248 = vmatpush1.msra.mxu0 0.0
        %1249 = vmatprep.subr.mxu0 0.0
        %1250 = vmatpush1.msra.mxu0 0.0
        %1251 = vmatprep.subr.mxu0 0.0
        %1252 = vmatpush1.msra.mxu0 0.0
        %1253 = vmatprep.subr.mxu0 0.0
        %1254 = vmatpush1.msra.mxu0 0.0
        %1255 = vmatprep.subr.mxu0 0.0
        %1256 = vmatpush1.msra.mxu0 0.0
        %1257 = vmatprep.subr.mxu0 0.0
        %1258 = vmatpush1.msra.mxu0 0.0
        %1259 = vmatprep.subr.mxu0 0.0
        %1260 = vmatpush1.msra.mxu0 0.0
        %1261 = vmatprep.subr.mxu0 0.0
        %1262 = vmatpush1.msra.mxu0 0.0
        %1263 = vmatprep.subr.mxu0 0.0
        %1264 = vmatpush1.msra.mxu0 0.0
        %1265 = vmatprep.subr.mxu0 0.0
        %1266 = vmatpush1.msra.mxu0 0.0
        %1267 = vmatprep.subr.mxu0 0.0
        %1268 = vmatpush1.msra.mxu0 0.0
        %1269 = vmatprep.subr.mxu0 0.0
        %1270 = vmatpush1.msra.mxu0 0.0
        %1271 = vmatprep.subr.mxu0 0.0
        %1272 = vmatpush1.msra.mxu0 0.0
        %1273 = vmatprep.subr.mxu0 0.0
        %1274 = vmatpush1.msra.mxu0 0.0
        %1275 = vmatprep.subr.mxu0 0.0
        %1276 = vmatpush1.msra.mxu0 0.0
        %1277 = vmatprep.subr.mxu0 0.0
        %1278 = vmatpush1.msra.mxu0 0.0
        %1279 = vmatprep.subr.mxu0 0.0
        %1280 = vmatpush1.msra.mxu0 0.0
        %1281 = vmatprep.subr.mxu0 0.0
        %1282 = vmatpush1.msra.mxu0 0.0
        %1283 = vmatprep.subr.mxu0 0.0
        %1284 = vmatpush1.msra.mxu0 0.0
        %1285 = vmatprep.subr.mxu0 0.0
        %1286 = vmatpush1.msra.mxu0 0.0
        %1287 = vmatprep.subr.mxu0 0.0
        %1288 = vmatpush1.msra.mxu0 0.0
        %1289 = vmatprep.subr.mxu0 0.0
        %1290 = vmatpush1.msra.mxu0 0.0
        %1291 = vmatprep.subr.mxu0 0.0
        %1292 = vmatpush1.msra.mxu0 0.0
        %1293 = vmatprep.subr.mxu0 0.0
        %1294 = vmatpush1.msra.mxu0 0.0
        %1295 = vmatprep.mubr.f32.mxu0 0.0
        %1296 = vmatmul.mubr.f32.gmra.mrb[0].mxu0 %v1072
        %v1297 = vpop.f32.mrb[0].mxu0
        %v1298 = vadd.f32 %v1063, %v1297
        %v1299 = vpop.f32.mrb[0].mxu0
        %v1300 = vadd.f32 %v1063, %v1299
        %1301 = vmatprep.mubr.f32.mxu0 0.0
        %1302 = vmatmul.mubr.f32.gmra.mrb[0].mxu0 %v1075
        %v1303 = vpop.f32.mrb[0].mxu0
        %v1304 = vadd.f32 %v1068, %v1303
        %v1305 = vpop.f32.mrb[0].mxu0
        %v1306 = vadd.f32 %v1068, %v1305
        %1307 = vdwg.mxu0
        %1308 = vmatprep.subr.mxu0 %v1049
        %1309 = vmatpush1.msra.mxu0 %v1048
        %1310 = vmatprep.subr.mxu0 0.0
        %1311 = vmatpush1.msra.mxu0 0.0
        %1312 = vmatprep.subr.mxu0 0.0
        %1313 = vmatpush1.msra.mxu0 0.0
        %1314 = vmatprep.subr.mxu0 0.0
        %1315 = vmatpush1.msra.mxu0 0.0
        %1316 = vmatprep.subr.mxu0 0.0
        %1317 = vmatpush1.msra.mxu0 0.0
        %1318 = vmatprep.subr.mxu0 0.0
        %1319 = vmatpush1.msra.mxu0 0.0
        %1320 = vmatprep.subr.mxu0 0.0
        %1321 = vmatpush1.msra.mxu0 0.0
        %1322 = vmatprep.subr.mxu0 0.0
        %1323 = vmatpush1.msra.mxu0 0.0
        %1324 = vmatprep.subr.mxu0 0.0
        %1325 = vmatpush1.msra.mxu0 0.0
        %1326 = vmatprep.subr.mxu0 0.0
        %1327 = vmatpush1.msra.mxu0 0.0
        %1328 = vmatprep.subr.mxu0 0.0
        %1329 = vmatpush1.msra.mxu0 0.0
        %1330 = vmatprep.subr.mxu0 0.0
        %1331 = vmatpush1.msra.mxu0 0.0
        %1332 = vmatprep.subr.mxu0 0.0
        %1333 = vmatpush1.msra.mxu0 0.0
        %1334 = vmatprep.subr.mxu0 0.0
        %1335 = vmatpush1.msra.mxu0 0.0
        %1336 = vmatprep.subr.mxu0 0.0
        %1337 = vmatpush1.msra.mxu0 0.0
        %1338 = vmatprep.subr.mxu0 0.0
        %1339 = vmatpush1.msra.mxu0 0.0
        %1340 = vmatprep.subr.mxu0 0.0
        %1341 = vmatpush1.msra.mxu0 0.0
        %1342 = vmatprep.subr.mxu0 0.0
        %1343 = vmatpush1.msra.mxu0 0.0
        %1344 = vmatprep.subr.mxu0 0.0
        %1345 = vmatpush1.msra.mxu0 0.0
        %1346 = vmatprep.subr.mxu0 0.0
        %1347 = vmatpush1.msra.mxu0 0.0
        %1348 = vmatprep.subr.mxu0 0.0
        %1349 = vmatpush1.msra.mxu0 0.0
        %1350 = vmatprep.subr.mxu0 0.0
        %1351 = vmatpush1.msra.mxu0 0.0
        %1352 = vmatprep.subr.mxu0 0.0
        %1353 = vmatpush1.msra.mxu0 0.0
        %1354 = vmatprep.subr.mxu0 0.0
        %1355 = vmatpush1.msra.mxu0 0.0
        %1356 = vmatprep.subr.mxu0 0.0
        %1357 = vmatpush1.msra.mxu0 0.0
        %1358 = vmatprep.subr.mxu0 0.0
        %1359 = vmatpush1.msra.mxu0 0.0
        %1360 = vmatprep.subr.mxu0 0.0
        %1361 = vmatpush1.msra.mxu0 0.0
        %1362 = vmatprep.subr.mxu0 0.0
        %1363 = vmatpush1.msra.mxu0 0.0
        %1364 = vmatprep.subr.mxu0 0.0
        %1365 = vmatpush1.msra.mxu0 0.0
        %1366 = vmatprep.subr.mxu0 0.0
        %1367 = vmatpush1.msra.mxu0 0.0
        %1368 = vmatprep.subr.mxu0 0.0
        %1369 = vmatpush1.msra.mxu0 0.0
        %1370 = vmatprep.subr.mxu0 0.0
        %1371 = vmatpush1.msra.mxu0 0.0
        %1372 = vmatprep.mubr.f32.mxu0 0.0
        %1373 = vmatmul.mubr.f32.gmra.mrb[0].mxu0 %v1072
        %v1374 = vpop.f32.mrb[0].mxu0
        %v1375 = vadd.f32 %v1063, %v1374
        %v1376 = vpop.f32.mrb[0].mxu0
        %v1377 = vadd.f32 %v1063, %v1376
        %1378 = vmatprep.mubr.f32.mxu0 0.0
        %1379 = vmatmul.mubr.f32.gmra.mrb[0].mxu0 %v1075
        %v1380 = vpop.f32.mrb[0].mxu0
        %v1381 = vadd.f32 %v1068, %v1380
        %v1382 = vpop.f32.mrb[0].mxu0
        %v1383 = vadd.f32 %v1068, %v1382
        %1384 = vdwg.mxu0
        %1385 = vmatprep.subr.mxu0 %v1051
        %1386 = vmatpush1.msra.mxu0 %v1050
        %1387 = vmatprep.subr.mxu0 0.0
        %1388 = vmatpush1.msra.mxu0 0.0
        %1389 = vmatprep.subr.mxu0 0.0
        %1390 = vmatpush1.msra.mxu0 0.0
        %1391 = vmatprep.subr.mxu0 0.0
        %1392 = vmatpush1.msra.mxu0 0.0
        %1393 = vmatprep.subr.mxu0 0.0
        %1394 = vmatpush1.msra.mxu0 0.0
        %1395 = vmatprep.subr.mxu0 0.0
        %1396 = vmatpush1.msra.mxu0 0.0
        %1397 = vmatprep.subr.mxu0 0.0
        %1398 = vmatpush1.msra.mxu0 0.0
        %1399 = vmatprep.subr.mxu0 0.0
        %1400 = vmatpush1.msra.mxu0 0.0
        %1401 = vmatprep.subr.mxu0 0.0
        %1402 = vmatpush1.msra.mxu0 0.0
        %1403 = vmatprep.subr.mxu0 0.0
        %1404 = vmatpush1.msra.mxu0 0.0
        %1405 = vmatprep.subr.mxu0 0.0
        %1406 = vmatpush1.msra.mxu0 0.0
        %1407 = vmatprep.subr.mxu0 0.0
        %1408 = vmatpush1.msra.mxu0 0.0
        %1409 = vmatprep.subr.mxu0 0.0
        %1410 = vmatpush1.msra.mxu0 0.0
        %1411 = vmatprep.subr.mxu0 0.0
        %1412 = vmatpush1.msra.mxu0 0.0
        %1413 = vmatprep.subr.mxu0 0.0
        %1414 = vmatpush1.msra.mxu0 0.0
        %1415 = vmatprep.subr.mxu0 0.0
        %1416 = vmatpush1.msra.mxu0 0.0
        %1417 = vmatprep.subr.mxu0 0.0
        %1418 = vmatpush1.msra.mxu0 0.0
        %1419 = vmatprep.subr.mxu0 0.0
        %1420 = vmatpush1.msra.mxu0 0.0
        %1421 = vmatprep.subr.mxu0 0.0
        %1422 = vmatpush1.msra.mxu0 0.0
        %1423 = vmatprep.subr.mxu0 0.0
        %1424 = vmatpush1.msra.mxu0 0.0
        %1425 = vmatprep.subr.mxu0 0.0
        %1426 = vmatpush1.msra.mxu0 0.0
        %1427 = vmatprep.subr.mxu0 0.0
        %1428 = vmatpush1.msra.mxu0 0.0
        %1429 = vmatprep.subr.mxu0 0.0
        %1430 = vmatpush1.msra.mxu0 0.0
        %1431 = vmatprep.subr.mxu0 0.0
        %1432 = vmatpush1.msra.mxu0 0.0
        %1433 = vmatprep.subr.mxu0 0.0
        %1434 = vmatpush1.msra.mxu0 0.0
        %1435 = vmatprep.subr.mxu0 0.0
        %1436 = vmatpush1.msra.mxu0 0.0
        %1437 = vmatprep.subr.mxu0 0.0
        %1438 = vmatpush1.msra.mxu0 0.0
        %1439 = vmatprep.subr.mxu0 0.0
        %1440 = vmatpush1.msra.mxu0 0.0
        %1441 = vmatprep.subr.mxu0 0.0
        %1442 = vmatpush1.msra.mxu0 0.0
        %1443 = vmatprep.subr.mxu0 0.0
        %1444 = vmatpush1.msra.mxu0 0.0
        %1445 = vmatprep.subr.mxu0 0.0
        %1446 = vmatpush1.msra.mxu0 0.0
        %1447 = vmatprep.subr.mxu0 0.0
        %1448 = vmatpush1.msra.mxu0 0.0
        %1449 = vmatprep.mubr.f32.mxu0 0.0
        %1450 = vmatmul.mubr.f32.gmra.mrb[0].mxu0 %v1072
        %v1451 = vpop.f32.mrb[0].mxu0
        %v1452 = vadd.f32 %v1063, %v1451
        %v1453 = vpop.f32.mrb[0].mxu0
        %v1454 = vadd.f32 %v1063, %v1453
        %1455 = vmatprep.mubr.f32.mxu0 0.0
        %1456 = vmatmul.mubr.f32.gmra.mrb[0].mxu0 %v1075
        %v1457 = vpop.f32.mrb[0].mxu0
        %v1458 = vadd.f32 %v1068, %v1457
        %v1459 = vpop.f32.mrb[0].mxu0
        %v1460 = vadd.f32 %v1068, %v1459
        %1461 = vdwg.mxu0
        %1462 = vmatprep.subr.mxu0 %v1053
        %1463 = vmatpush1.msra.mxu0 %v1052
        %1464 = vmatprep.subr.mxu0 0.0
        %1465 = vmatpush1.msra.mxu0 0.0
        %1466 = vmatprep.subr.mxu0 0.0
        %1467 = vmatpush1.msra.mxu0 0.0
        %1468 = vmatprep.subr.mxu0 0.0
        %1469 = vmatpush1.msra.mxu0 0.0
        %1470 = vmatprep.subr.mxu0 0.0
        %1471 = vmatpush1.msra.mxu0 0.0
        %1472 = vmatprep.subr.mxu0 0.0
        %1473 = vmatpush1.msra.mxu0 0.0
        %1474 = vmatprep.subr.mxu0 0.0
        %1475 = vmatpush1.msra.mxu0 0.0
        %1476 = vmatprep.subr.mxu0 0.0
        %1477 = vmatpush1.msra.mxu0 0.0
        %1478 = vmatprep.subr.mxu0 0.0
        %1479 = vmatpush1.msra.mxu0 0.0
        %1480 = vmatprep.subr.mxu0 0.0
        %1481 = vmatpush1.msra.mxu0 0.0
        %1482 = vmatprep.subr.mxu0 0.0
        %1483 = vmatpush1.msra.mxu0 0.0
        %1484 = vmatprep.subr.mxu0 0.0
        %1485 = vmatpush1.msra.mxu0 0.0
        %1486 = vmatprep.subr.mxu0 0.0
        %1487 = vmatpush1.msra.mxu0 0.0
        %1488 = vmatprep.subr.mxu0 0.0
        %1489 = vmatpush1.msra.mxu0 0.0
        %1490 = vmatprep.subr.mxu0 0.0
        %1491 = vmatpush1.msra.mxu0 0.0
        %1492 = vmatprep.subr.mxu0 0.0
        %1493 = vmatpush1.msra.mxu0 0.0
        %1494 = vmatprep.subr.mxu0 0.0
        %1495 = vmatpush1.msra.mxu0 0.0
        %1496 = vmatprep.subr.mxu0 0.0
        %1497 = vmatpush1.msra.mxu0 0.0
        %1498 = vmatprep.subr.mxu0 0.0
        %1499 = vmatpush1.msra.mxu0 0.0
        %1500 = vmatprep.subr.mxu0 0.0
        %1501 = vmatpush1.msra.mxu0 0.0
        %1502 = vmatprep.subr.mxu0 0.0
        %1503 = vmatpush1.msra.mxu0 0.0
        %1504 = vmatprep.subr.mxu0 0.0
        %1505 = vmatpush1.msra.mxu0 0.0
        %1506 = vmatprep.subr.mxu0 0.0
        %1507 = vmatpush1.msra.mxu0 0.0
        %1508 = vmatprep.subr.mxu0 0.0
        %1509 = vmatpush1.msra.mxu0 0.0
        %1510 = vmatprep.subr.mxu0 0.0
        %1511 = vmatpush1.msra.mxu0 0.0
        %1512 = vmatprep.subr.mxu0 0.0
        %1513 = vmatpush1.msra.mxu0 0.0
        %1514 = vmatprep.subr.mxu0 0.0
        %1515 = vmatpush1.msra.mxu0 0.0
        %1516 = vmatprep.subr.mxu0 0.0
        %1517 = vmatpush1.msra.mxu0 0.0
        %1518 = vmatprep.subr.mxu0 0.0
        %1519 = vmatpush1.msra.mxu0 0.0
        %1520 = vmatprep.subr.mxu0 0.0
        %1521 = vmatpush1.msra.mxu0 0.0
        %1522 = vmatprep.subr.mxu0 0.0
        %1523 = vmatpush1.msra.mxu0 0.0
        %1524 = vmatprep.subr.mxu0 0.0
        %1525 = vmatpush1.msra.mxu0 0.0
        %1526 = vmatprep.mubr.f32.mxu0 0.0
        %1527 = vmatmul.mubr.f32.gmra.mrb[0].mxu0 %v1072
        %v1528 = vpop.f32.mrb[0].mxu0
        %v1529 = vadd.f32 %v1063, %v1528
        %v1530 = vpop.f32.mrb[0].mxu0
        %v1531 = vadd.f32 %v1063, %v1530
        %1532 = vmatprep.mubr.f32.mxu0 0.0
        %1533 = vmatmul.mubr.f32.gmra.mrb[0].mxu0 %v1075
        %v1534 = vpop.f32.mrb[0].mxu0
        %v1535 = vadd.f32 %v1068, %v1534
        %v1536 = vpop.f32.mrb[0].mxu0
        %v1537 = vadd.f32 %v1068, %v1536
        %1538 = vdwg.mxu0
        %1539 = vmatprep.subr.mxu0 %v1055
        %1540 = vmatpush1.msra.mxu0 %v1054
        %1541 = vmatprep.subr.mxu0 0.0
        %1542 = vmatpush1.msra.mxu0 0.0
        %1543 = vmatprep.subr.mxu0 0.0
        %1544 = vmatpush1.msra.mxu0 0.0
        %1545 = vmatprep.subr.mxu0 0.0
        %1546 = vmatpush1.msra.mxu0 0.0
        %1547 = vmatprep.subr.mxu0 0.0
        %1548 = vmatpush1.msra.mxu0 0.0
        %1549 = vmatprep.subr.mxu0 0.0
        %1550 = vmatpush1.msra.mxu0 0.0
        %1551 = vmatprep.subr.mxu0 0.0
        %1552 = vmatpush1.msra.mxu0 0.0
        %1553 = vmatprep.subr.mxu0 0.0
        %1554 = vmatpush1.msra.mxu0 0.0
        %1555 = vmatprep.subr.mxu0 0.0
        %1556 = vmatpush1.msra.mxu0 0.0
        %1557 = vmatprep.subr.mxu0 0.0
        %1558 = vmatpush1.msra.mxu0 0.0
        %1559 = vmatprep.subr.mxu0 0.0
        %1560 = vmatpush1.msra.mxu0 0.0
        %1561 = vmatprep.subr.mxu0 0.0
        %1562 = vmatpush1.msra.mxu0 0.0
        %1563 = vmatprep.subr.mxu0 0.0
        %1564 = vmatpush1.msra.mxu0 0.0
        %1565 = vmatprep.subr.mxu0 0.0
        %1566 = vmatpush1.msra.mxu0 0.0
        %1567 = vmatprep.subr.mxu0 0.0
        %1568 = vmatpush1.msra.mxu0 0.0
        %1569 = vmatprep.subr.mxu0 0.0
        %1570 = vmatpush1.msra.mxu0 0.0
        %1571 = vmatprep.subr.mxu0 0.0
        %1572 = vmatpush1.msra.mxu0 0.0
        %1573 = vmatprep.subr.mxu0 0.0
        %1574 = vmatpush1.msra.mxu0 0.0
        %1575 = vmatprep.subr.mxu0 0.0
        %1576 = vmatpush1.msra.mxu0 0.0
        %1577 = vmatprep.subr.mxu0 0.0
        %1578 = vmatpush1.msra.mxu0 0.0
        %1579 = vmatprep.subr.mxu0 0.0
        %1580 = vmatpush1.msra.mxu0 0.0
        %1581 = vmatprep.subr.mxu0 0.0
        %1582 = vmatpush1.msra.mxu0 0.0
        %1583 = vmatprep.subr.mxu0 0.0
        %1584 = vmatpush1.msra.mxu0 0.0
        %1585 = vmatprep.subr.mxu0 0.0
        %1586 = vmatpush1.msra.mxu0 0.0
        %1587 = vmatprep.subr.mxu0 0.0
        %1588 = vmatpush1.msra.mxu0 0.0
        %1589 = vmatprep.subr.mxu0 0.0
        %1590 = vmatpush1.msra.mxu0 0.0
        %1591 = vmatprep.subr.mxu0 0.0
        %1592 = vmatpush1.msra.mxu0 0.0
        %1593 = vmatprep.subr.mxu0 0.0
        %1594 = vmatpush1.msra.mxu0 0.0
        %1595 = vmatprep.subr.mxu0 0.0
        %1596 = vmatpush1.msra.mxu0 0.0
        %1597 = vmatprep.subr.mxu0 0.0
        %1598 = vmatpush1.msra.mxu0 0.0
        %1599 = vmatprep.subr.mxu0 0.0
        %1600 = vmatpush1.msra.mxu0 0.0
        %1601 = vmatprep.subr.mxu0 0.0
        %1602 = vmatpush1.msra.mxu0 0.0
        %1603 = vmatprep.mubr.f32.mxu0 0.0
        %1604 = vmatmul.mubr.f32.gmra.mrb[0].mxu0 %v1072
        %v1605 = vpop.f32.mrb[0].mxu0
        %v1606 = vadd.f32 %v1063, %v1605
        %v1607 = vpop.f32.mrb[0].mxu0
        %v1608 = vadd.f32 %v1063, %v1607
        %1609 = vmatprep.mubr.f32.mxu0 0.0
        %1610 = vmatmul.mubr.f32.gmra.mrb[0].mxu0 %v1075
        %v1611 = vpop.f32.mrb[0].mxu0
        %v1612 = vadd.f32 %v1068, %v1611
        %v1613 = vpop.f32.mrb[0].mxu0
        %v1614 = vadd.f32 %v1068, %v1613
        %1615 = vdwg.mxu0
        %1616 = vmatprep.subr.mxu0 %v1057
        %1617 = vmatpush1.msra.mxu0 %v1056
        %1618 = vmatprep.subr.mxu0 0.0
        %1619 = vmatpush1.msra.mxu0 0.0
        %1620 = vmatprep.subr.mxu0 0.0
        %1621 = vmatpush1.msra.mxu0 0.0
        %1622 = vmatprep.subr.mxu0 0.0
        %1623 = vmatpush1.msra.mxu0 0.0
        %1624 = vmatprep.subr.mxu0 0.0
        %1625 = vmatpush1.msra.mxu0 0.0
        %1626 = vmatprep.subr.mxu0 0.0
        %1627 = vmatpush1.msra.mxu0 0.0
        %1628 = vmatprep.subr.mxu0 0.0
        %1629 = vmatpush1.msra.mxu0 0.0
        %1630 = vmatprep.subr.mxu0 0.0
        %1631 = vmatpush1.msra.mxu0 0.0
        %1632 = vmatprep.subr.mxu0 0.0
        %1633 = vmatpush1.msra.mxu0 0.0
        %1634 = vmatprep.subr.mxu0 0.0
        %1635 = vmatpush1.msra.mxu0 0.0
        %1636 = vmatprep.subr.mxu0 0.0
        %1637 = vmatpush1.msra.mxu0 0.0
        %1638 = vmatprep.subr.mxu0 0.0
        %1639 = vmatpush1.msra.mxu0 0.0
        %1640 = vmatprep.subr.mxu0 0.0
        %1641 = vmatpush1.msra.mxu0 0.0
        %1642 = vmatprep.subr.mxu0 0.0
        %1643 = vmatpush1.msra.mxu0 0.0
        %1644 = vmatprep.subr.mxu0 0.0
        %1645 = vmatpush1.msra.mxu0 0.0
        %1646 = vmatprep.subr.mxu0 0.0
        %1647 = vmatpush1.msra.mxu0 0.0
        %1648 = vmatprep.subr.mxu0 0.0
        %1649 = vmatpush1.msra.mxu0 0.0
        %1650 = vmatprep.subr.mxu0 0.0
        %1651 = vmatpush1.msra.mxu0 0.0
        %1652 = vmatprep.subr.mxu0 0.0
        %1653 = vmatpush1.msra.mxu0 0.0
        %1654 = vmatprep.subr.mxu0 0.0
        %1655 = vmatpush1.msra.mxu0 0.0
        %1656 = vmatprep.subr.mxu0 0.0
        %1657 = vmatpush1.msra.mxu0 0.0
        %1658 = vmatprep.subr.mxu0 0.0
        %1659 = vmatpush1.msra.mxu0 0.0
        %1660 = vmatprep.subr.mxu0 0.0
        %1661 = vmatpush1.msra.mxu0 0.0
        %1662 = vmatprep.subr.mxu0 0.0
        %1663 = vmatpush1.msra.mxu0 0.0
        %1664 = vmatprep.subr.mxu0 0.0
        %1665 = vmatpush1.msra.mxu0 0.0
        %1666 = vmatprep.subr.mxu0 0.0
        %1667 = vmatpush1.msra.mxu0 0.0
        %1668 = vmatprep.subr.mxu0 0.0
        %1669 = vmatpush1.msra.mxu0 0.0
        %1670 = vmatprep.subr.mxu0 0.0
        %1671 = vmatpush1.msra.mxu0 0.0
        %1672 = vmatprep.subr.mxu0 0.0
        %1673 = vmatpush1.msra.mxu0 0.0
        %1674 = vmatprep.subr.mxu0 0.0
        %1675 = vmatpush1.msra.mxu0 0.0
        %1676 = vmatprep.subr.mxu0 0.0
        %1677 = vmatpush1.msra.mxu0 0.0
        %1678 = vmatprep.subr.mxu0 0.0
        %1679 = vmatpush1.msra.mxu0 0.0
        %1680 = vmatprep.mubr.f32.mxu0 0.0
        %1681 = vmatmul.mubr.f32.gmra.mrb[0].mxu0 %v1072
        %v1682 = vpop.f32.mrb[0].mxu0
        %v1683 = vadd.f32 %v1063, %v1682
        %v1684 = vpop.f32.mrb[0].mxu0
        %v1685 = vadd.f32 %v1063, %v1684
        %1686 = vmatprep.mubr.f32.mxu0 0.0
        %1687 = vmatmul.mubr.f32.gmra.mrb[0].mxu0 %v1075
        %v1688 = vpop.f32.mrb[0].mxu0
        %v1689 = vadd.f32 %v1068, %v1688
        %v1690 = vpop.f32.mrb[0].mxu0
        %v1691 = vadd.f32 %v1068, %v1690
        %1692 = vdwg.mxu0
        %v1693 = vmax.f32 %v1144, 0.0
        %v1694 = vmax.f32 %v1146, 0.0
        %v1695 = vmax.f32 %v1221, 0.0
        %v1696 = vmax.f32 %v1223, 0.0
        %v1697 = vmax.f32 %v1298, 0.0
        %v1698 = vmax.f32 %v1300, 0.0
        %v1699 = vmax.f32 %v1375, 0.0
        %v1700 = vmax.f32 %v1377, 0.0
        %v1701 = vmax.f32 %v1452, 0.0
        %v1702 = vmax.f32 %v1454, 0.0
        %v1703 = vmax.f32 %v1529, 0.0
        %v1704 = vmax.f32 %v1531, 0.0
        %v1705 = vmax.f32 %v1606, 0.0
        %v1706 = vmax.f32 %v1608, 0.0
        %v1707 = vmax.f32 %v1683, 0.0
        %v1708 = vmax.f32 %v1685, 0.0
        %v1709 = vmax.f32 %v1150, 0.0
        %v1710 = vmax.f32 %v1152, 0.0
        %v1711 = vmax.f32 %v1227, 0.0
        %v1712 = vmax.f32 %v1229, 0.0
        %v1713 = vmax.f32 %v1304, 0.0
        %v1714 = vmax.f32 %v1306, 0.0
        %v1715 = vmax.f32 %v1381, 0.0
        %v1716 = vmax.f32 %v1383, 0.0
        %v1717 = vmax.f32 %v1458, 0.0
        %v1718 = vmax.f32 %v1460, 0.0
        %v1719 = vmax.f32 %v1535, 0.0
        %v1720 = vmax.f32 %v1537, 0.0
        %v1721 = vmax.f32 %v1612, 0.0
        %v1722 = vmax.f32 %v1614, 0.0
        %v1723 = vmax.f32 %v1689, 0.0
        %v1724 = vmax.f32 %v1691, 0.0
        %1725 = vst [vmem:[%s324] sm:$0xff] %v1693
        %1726 = vst [vmem:[%s324 + $0x8] sm:$0xff] %v1694
        %1727 = vst [vmem:[%s324 + $0x10] sm:$0xff] %v1695
        %1728 = vst [vmem:[%s324 + $0x18] sm:$0xff] %v1696
        %1729 = vst [vmem:[%s324 + $0x20] sm:$0xff] %v1697
        %1730 = vst [vmem:[%s324 + $0x28] sm:$0xff] %v1698
        %1731 = vst [vmem:[%s324 + $0x30] sm:$0xff] %v1699
        %1732 = vst [vmem:[%s324 + $0x38] sm:$0xff] %v1700
        %1733 = vst [vmem:[%s324 + $0x40] sm:$0xff] %v1701
        %1734 = vst [vmem:[%s324 + $0x48] sm:$0xff] %v1702
        %1735 = vst [vmem:[%s324 + $0x50] sm:$0xff] %v1703
        %1736 = vst [vmem:[%s324 + $0x58] sm:$0xff] %v1704
        %1737 = vst [vmem:[%s324 + $0x60] sm:$0xff] %v1705
        %1738 = vst [vmem:[%s324 + $0x68] sm:$0xff] %v1706
        %1739 = vst [vmem:[%s324 + $0x70] sm:$0xff] %v1707
        %1740 = vst [vmem:[%s324 + $0x78] sm:$0xff] %v1708
        %1741 = vst [vmem:[%s324 + $0x80] sm:$0xff] %v1709
        %1742 = vst [vmem:[%s324 + $0x88] sm:$0xff] %v1710
        %1743 = vst [vmem:[%s324 + $0x90] sm:$0xff] %v1711
        %1744 = vst [vmem:[%s324 + $0x98] sm:$0xff] %v1712
        %1745 = vst [vmem:[%s324 + $0xa0] sm:$0xff] %v1713
        %1746 = vst [vmem:[%s324 + $0xa8] sm:$0xff] %v1714
        %1747 = vst [vmem:[%s324 + $0xb0] sm:$0xff] %v1715
        %1748 = vst [vmem:[%s324 + $0xb8] sm:$0xff] %v1716
        %1749 = vst [vmem:[%s324 + $0xc0] sm:$0xff] %v1717
        %1750 = vst [vmem:[%s324 + $0xc8] sm:$0xff] %v1718
        %1751 = vst [vmem:[%s324 + $0xd0] sm:$0xff] %v1719
        %1752 = vst [vmem:[%s324 + $0xd8] sm:$0xff] %v1720
        %1753 = vst [vmem:[%s324 + $0xe0] sm:$0xff] %v1721
        %1754 = vst [vmem:[%s324 + $0xe8] sm:$0xff] %v1722
        %1755 = vst [vmem:[%s324 + $0xf0] sm:$0xff] %v1723
        %1756 = vst [vmem:[%s324 + $0xf8] sm:$0xff] %v1724
        %s1757 = sand.u32 %s206, 1
        %s1758 = scalar_lea.sflag [#allocation6], %s1757
        %s1759 = sand.u32 %s206, 1
        %s1760 = smul.addr %s1759, 256
        %s1761 = scalar_lea.vmem [#allocation7], %s1760
        // Predicated region
        $region57: #{tpu_custom_call.1} parent=51 // pred_check
          %p1762 = pneg %p216
        $region58: #{tpu_custom_call.1} parent=51 // pred_check_branch
          %1764 = sbr.rel (%p1762) target = $region60
        $region59: #{tpu_custom_call.1} parent=51 // pred_region
          %s1766 = ssub.s32 4096, 4096
          %1767 = vsyncadd %s1758, %s1766
          %s1768 = smul.addr %s25, 32
          %s1769 = smul.addr %s1768, 128
          %s1770 = scalar_lea.hbm %s8, %s1769
          %s1771 = sshll.u32 %s1761, 4
          %s1772 = int_to_ptr.vmem [resolvable:$true] %s1771
          %1777 = dma.vmem_to_hbm [thread:$0]  %s1772, 4096, %s1770, %s1758, 2048, 2048, 128
        $region60: #{tpu_custom_call.1} parent=51 // pred_fallthru
          _
      $region52: #{tpu_custom_call.1} parent=5 // pred_fallthru
        _
      %p1778 = scmp.le.s32.totalorder 2, %s20
      // Predicated region
      $region61: #{tpu_custom_call.1} parent=5 // pred_check
        %p1779 = pneg %p1778
      $region62: #{tpu_custom_call.1} parent=5 // pred_check_branch
        %1781 = sbr.rel (%p1779) target = $region64
      $region63: #{tpu_custom_call.1} parent=5 // pred_region
        %s1782 = ssub.s32 %s20, 2
        // Predicated region
        $region65: #{tpu_custom_call.1} parent=63 // pred_check
          %p1783 = pneg %p222
        $region66: #{tpu_custom_call.1} parent=63 // pred_check_branch
          %1785 = sbr.rel (%p1783) target = $region68
        $region67: #{tpu_custom_call.1} parent=63 // pred_region
          %s1786 = sand.u32 %s207, 1
          %s1787 = scalar_lea.sflag [#allocation6], %s1786
          %s1788 = sand.u32 %s207, 1
          %s1789 = smul.addr %s1788, 256
          %s1790 = scalar_lea.vmem [#allocation7], %s1789
          %1791 = dma.done %s1787, 4096
        $region68: #{tpu_custom_call.1} parent=63 // pred_fallthru
          _
      $region64: #{tpu_custom_call.1} parent=5 // pred_fallthru
        _
    $region6: #{tpu_custom_call.1} parent=1 // loop_footer
      %s24 = sadd.s32 1, %s20
    $region7: #{tpu_custom_call.1} parent=1 // loop_footer_branch
      %19 = sbr.rel target = $region3
    $region8: #{tpu_custom_call.1} parent=1 // loop_exit
      _
    %1792 = vsyncpa [#allocation5], 1
    %s1793 = scalar_lea.sflag [#allocation5], 1
    %1794 = vsyncpa %s1793, 1
    %1795 = vsyncpa [#allocation6], 1
    %s1796 = scalar_lea.sflag [#allocation6], 1
    %1797 = vsyncpa %s1796, 1

</llo_original>
